<compile_context>
chip_gen: v5e
topology: v5e:2x2
jax: 0.10.0
libtpu: 0.0.40
codegen_flags: <defaults>
</compile_context>

<pallas_src>
import jax
import jax.numpy as jnp
from jax.experimental import pallas as pl
from jax.experimental.pallas import tpu as pltpu

D_IN = 1536
D_H1, D_H2, D_H3, D_OUT = 400, 150, 64, 1
# Lane-padded hidden dims (multiples of 128); padded lanes are exactly zero.
P_H1, P_H2, P_H3 = 512, 256, 128
BN_EPS = 1e-5


def _round_up(n, m):
    return (n + m - 1) // m * m


# ----------------------------------------------------------------------------
# Kernel
# ----------------------------------------------------------------------------
def upgraded_net_kernel(x_ref,
                        w1_ref, t1_ref,
                        w2_ref, t2_ref,
                        w3_ref, t3_ref,
                        w4_ref, b4_ref,
                        o_ref):
    # Each layer is relu(x @ w' + t') with bias+BN pre-folded into (w', t').
    x = x_ref[...]                                                  # [TB, 1536]

    h = jnp.dot(x, w1_ref[...], preferred_element_type=jnp.float32)
    h = jnp.maximum(h + t1_ref[...], 0.0)                           # [TB, 512]

    h = jnp.dot(h, w2_ref[...], preferred_element_type=jnp.float32)
    h = jnp.maximum(h + t2_ref[...], 0.0)                           # [TB, 256]

    h = jnp.dot(h, w3_ref[...], preferred_element_type=jnp.float32)
    h = jnp.maximum(h + t3_ref[...], 0.0)                           # [TB, 128]

    # fc4 (128 -> 1, padded cols are zero): VPU multiply + lane reduce instead
    # of an MXU pass with N=1.
    y = jnp.sum(h * w4_ref[...], axis=-1, keepdims=True) + b4_ref[...]
    o_ref[...] = jax.nn.sigmoid(y)                                  # [TB, 1]


# ----------------------------------------------------------------------------
# Wrapper
# ----------------------------------------------------------------------------
def upgraded_net_forward(x, kp, tile_b=512):
    """x: [B, 1536] float32. kp: prepared (folded + padded) kernel params."""
    B = x.shape[0]
    tb = min(tile_b, _round_up(B, 8))      # small-batch friendly, sublane mult.
    B_pad = _round_up(B, tb)
    if B_pad != B:
        x = jnp.pad(x, ((0, B_pad - B), (0, 0)))
    n_tiles = B_pad // tb

    def resident(shape):
        # Whole array, same block every grid step -> stays in VMEM.
        return pl.BlockSpec(shape, lambda i: (0, 0))

    out = pl.pallas_call(
        upgraded_net_kernel,
        out_shape=jax.ShapeDtypeStruct((B_pad, D_OUT), jnp.float32),
        grid=(n_tiles,),
        in_specs=[
            pl.BlockSpec((tb, D_IN), lambda i: (i, 0)),   # x tile (pipelined)
            resident((D_IN, P_H1)), resident((1, P_H1)),  # w1', t1'
            resident((P_H1, P_H2)), resident((1, P_H2)),  # w2', t2'
            resident((P_H2, P_H3)), resident((1, P_H3)),  # w3', t3'
            resident((1, P_H3)), resident((1, 1)),        # w4 row, b4
        ],
        out_specs=pl.BlockSpec((tb, D_OUT), lambda i: (i, 0)),
        compiler_params=pltpu.CompilerParams(
            dimension_semantics=("parallel",),
            vmem_limit_bytes=32 << 20,
        ),
    )(x, kp["w1"], kp["t1"], kp["w2"], kp["t2"],
      kp["w3"], kp["t3"], kp["w4r"], kp["b4"])
    return out[:B]


# ----------------------------------------------------------------------------
# Parameter construction (PyTorch-equivalent init) and host-side prep
# ----------------------------------------------------------------------------
def _linear_init(key, fan_in, fan_out):
    # PyTorch nn.Linear default: U(-1/sqrt(fan_in), 1/sqrt(fan_in))
    kw, kb = jax.random.split(key)
    bound = 1.0 / jnp.sqrt(fan_in)
    w = jax.random.uniform(kw, (fan_in, fan_out), jnp.float32, -bound, bound)
    b = jax.random.uniform(kb, (1, fan_out), jnp.float32, -bound, bound)
    return w, b


def _bn_fold(key, feat):
    # Deterministic non-trivial gamma/beta/running stats, folded to scale/shift.
    kg, kb, km, kv = jax.random.split(key, 4)
    gamma = 1.0 + 0.1 * jax.random.normal(kg, (1, feat), jnp.float32)
    beta = 0.1 * jax.random.normal(kb, (1, feat), jnp.float32)
    mean = 0.05 * jax.random.normal(km, (1, feat), jnp.float32)
    var = 1.0 + 0.1 * jax.random.uniform(kv, (1, feat), jnp.float32)
    scale = gamma / jnp.sqrt(var + BN_EPS)
    shift = beta - mean * scale
    return scale, shift


def init_params(key):
    keys = jax.random.split(key, 7)
    w1, b1 = _linear_init(keys[0], D_IN, D_H1)
    w2, b2 = _linear_init(keys[1], D_H1, D_H2)
    w3, b3 = _linear_init(keys[2], D_H2, D_H3)
    w4, b4 = _linear_init(keys[3], D_H3, D_OUT)
    s1, t1 = _bn_fold(keys[4], D_H1)
    s2, t2 = _bn_fold(keys[5], D_H2)
    s3, t3 = _bn_fold(keys[6], D_H3)
    return dict(w1=w1, b1=b1, s1=s1, t1=t1,
                w2=w2, b2=b2, s2=s2, t2=t2,
                w3=w3, b3=b3, s3=s3, t3=t3,
                w4=w4, b4=b4)


def prepare_kernel_params(p):
    """Fold bias + BN affine into weights, then zero-pad to lane multiples."""
    def fold(w, b, s, t):
        return w * s, b * s + t          # w': [in,out] * [1,out];  t': [1,out]

    w1, t1 = fold(p["w1"], p["b1"], p["s1"], p["t1"])
    w2, t2 = fold(p["w2"], p["b2"], p["s2"], p["t2"])
    w3, t3 = fold(p["w3"], p["b3"], p["s3"], p["t3"])

    def pad_cols(a, n):
        return jnp.pad(a, ((0, 0), (0, n - a.shape[1])))

    def pad_rows(a, n):
        return jnp.pad(a, ((0, n - a.shape[0]), (0, 0)))

    return dict(
        w1=pad_cols(w1, P_H1),                       # [1536, 512]
        t1=pad_cols(t1, P_H1),                       # [1, 512]
        w2=pad_cols(pad_rows(w2, P_H1), P_H2),       # [512, 256]
        t2=pad_cols(t2, P_H2),                       # [1, 256]
        w3=pad_cols(pad_rows(w3, P_H2), P_H3),       # [256, 128]
        t3=pad_cols(t3, P_H3),                       # [1, 128]
        w4r=pad_cols(p["w4"].T, P_H3),               # [1, 128] row vector
        b4=p["b4"].reshape(1, 1),                    # [1, 1]
    )


def reference_forward(x, p):
    h = jnp.maximum((x @ p["w1"] + p["b1"]) * p["s1"] + p["t1"], 0.0)
    h = jnp.maximum((h @ p["w2"] + p["b2"]) * p["s2"] + p["t2"], 0.0)
    h = jnp.maximum((h @ p["w3"] + p["b3"]) * p["s3"] + p["t3"], 0.0)
    return jax.nn.sigmoid(h @ p["w4"] + p["b4"])


if __name__ == "__main__":
    key = jax.random.PRNGKey(0)
    kx, kp_key = jax.random.split(key)
    B = 8
    x = jax.random.normal(kx, (B, D_IN), jnp.float32)

    params = init_params(kp_key)
    kparams = prepare_kernel_params(params)

    out = upgraded_net_forward(x, kparams)
    out = jax.block_until_ready(out)

    ref = reference_forward(x, params)
    assert out.shape == (B, D_OUT)
    assert jnp.allclose(out, ref, atol=1e-5, rtol=1e-5), "mismatch vs reference"
    print("KERNEL_OK")
</pallas_src>

<mosaic_0001>
module attributes {stable_mosaic.version = 11 : i64} {
  func.func @upgraded_net_kernel(%arg0: i32, %arg1: memref<8x1536xf32, #tpu.memory_space<vmem>>, %arg2: memref<1536x512xf32, #tpu.memory_space<vmem>>, %arg3: memref<1x512xf32, #tpu.memory_space<vmem>>, %arg4: memref<512x256xf32, #tpu.memory_space<vmem>>, %arg5: memref<1x256xf32, #tpu.memory_space<vmem>>, %arg6: memref<256x128xf32, #tpu.memory_space<vmem>>, %arg7: memref<1x128xf32, #tpu.memory_space<vmem>>, %arg8: memref<1x128xf32, #tpu.memory_space<vmem>>, %arg9: memref<1x1xf32, #tpu.memory_space<vmem>>, %arg10: memref<8x1xf32, #tpu.memory_space<vmem>>) attributes {dimension_semantics = [#tpu.dimension_semantics<parallel>], iteration_bounds = array<i64: 1>, scalar_prefetch = 0 : i64, scratch_operands = 0 : i64, tpu.core_type = #tpu.core_type<tc>, window_params = [{transform_indices = @transform_0, window_bounds = array<i64: 8, 1536>}, {pipeline_mode = #tpu.pipeline_mode<synchronous>, transform_indices = @transform_1, window_bounds = array<i64: 1536, 512>}, {pipeline_mode = #tpu.pipeline_mode<synchronous>, transform_indices = @transform_2, window_bounds = array<i64: 1, 512>}, {pipeline_mode = #tpu.pipeline_mode<synchronous>, transform_indices = @transform_3, window_bounds = array<i64: 512, 256>}, {pipeline_mode = #tpu.pipeline_mode<synchronous>, transform_indices = @transform_4, window_bounds = array<i64: 1, 256>}, {pipeline_mode = #tpu.pipeline_mode<synchronous>, transform_indices = @transform_5, window_bounds = array<i64: 256, 128>}, {pipeline_mode = #tpu.pipeline_mode<synchronous>, transform_indices = @transform_6, window_bounds = array<i64: 1, 128>}, {pipeline_mode = #tpu.pipeline_mode<synchronous>, transform_indices = @transform_7, window_bounds = array<i64: 1, 128>}, {pipeline_mode = #tpu.pipeline_mode<synchronous>, transform_indices = @transform_8, window_bounds = array<i64: 1, 1>}, {transform_indices = @transform_9, window_bounds = array<i64: 8, 1>}]} {
    %c0 = arith.constant 0 : index
    %c0_0 = arith.constant 0 : index
    %0 = vector.load %arg1[%c0, %c0_0] : memref<8x1536xf32, #tpu.memory_space<vmem>>, vector<8x1536xf32>
    %c0_1 = arith.constant 0 : index
    %c0_2 = arith.constant 0 : index
    %1 = vector.load %arg2[%c0_1, %c0_2] : memref<1536x512xf32, #tpu.memory_space<vmem>>, vector<1536x512xf32>
    %cst = arith.constant dense<0.000000e+00> : vector<8x512xf32>
    %2 = tpu.matmul %0, %1, %cst {dimension_numbers = #tpu.dot_dimension_numbers<[1], [0], [0], [1], [0, 0, 1, 1], [], []>} : vector<8x1536xf32>, vector<1536x512xf32>, vector<8x512xf32> -> vector<8x512xf32>
    %c0_3 = arith.constant 0 : index
    %c0_4 = arith.constant 0 : index
    %3 = vector.load %arg3[%c0_3, %c0_4] : memref<1x512xf32, #tpu.memory_space<vmem>>, vector<1x512xf32>
    %4 = vector.broadcast %3 : vector<1x512xf32> to vector<8x512xf32>
    %5 = arith.addf %2, %4 : vector<8x512xf32>
    %cst_5 = arith.constant 0.000000e+00 : f32
    %6 = vector.broadcast %cst_5 : f32 to vector<8x512xf32>
    %7 = arith.maximumf %5, %6 : vector<8x512xf32>
    %c0_6 = arith.constant 0 : index
    %c0_7 = arith.constant 0 : index
    %8 = vector.load %arg4[%c0_6, %c0_7] : memref<512x256xf32, #tpu.memory_space<vmem>>, vector<512x256xf32>
    %cst_8 = arith.constant dense<0.000000e+00> : vector<8x256xf32>
    %9 = tpu.matmul %7, %8, %cst_8 {dimension_numbers = #tpu.dot_dimension_numbers<[1], [0], [0], [1], [0, 0, 1, 1], [], []>} : vector<8x512xf32>, vector<512x256xf32>, vector<8x256xf32> -> vector<8x256xf32>
    %c0_9 = arith.constant 0 : index
    %c0_10 = arith.constant 0 : index
    %10 = vector.load %arg5[%c0_9, %c0_10] : memref<1x256xf32, #tpu.memory_space<vmem>>, vector<1x256xf32>
    %11 = vector.broadcast %10 : vector<1x256xf32> to vector<8x256xf32>
    %12 = arith.addf %9, %11 : vector<8x256xf32>
    %cst_11 = arith.constant 0.000000e+00 : f32
    %13 = vector.broadcast %cst_11 : f32 to vector<8x256xf32>
    %14 = arith.maximumf %12, %13 : vector<8x256xf32>
    %c0_12 = arith.constant 0 : index
    %c0_13 = arith.constant 0 : index
    %15 = vector.load %arg6[%c0_12, %c0_13] : memref<256x128xf32, #tpu.memory_space<vmem>>, vector<256x128xf32>
    %cst_14 = arith.constant dense<0.000000e+00> : vector<8x128xf32>
    %16 = tpu.matmul %14, %15, %cst_14 {dimension_numbers = #tpu.dot_dimension_numbers<[1], [0], [0], [1], [0, 0, 1, 1], [], []>} : vector<8x256xf32>, vector<256x128xf32>, vector<8x128xf32> -> vector<8x128xf32>
    %c0_15 = arith.constant 0 : index
    %c0_16 = arith.constant 0 : index
    %17 = vector.load %arg7[%c0_15, %c0_16] : memref<1x128xf32, #tpu.memory_space<vmem>>, vector<1x128xf32>
    %18 = vector.broadcast %17 : vector<1x128xf32> to vector<8x128xf32>
    %19 = arith.addf %16, %18 : vector<8x128xf32>
    %cst_17 = arith.constant 0.000000e+00 : f32
    %20 = vector.broadcast %cst_17 : f32 to vector<8x128xf32>
    %21 = arith.maximumf %19, %20 : vector<8x128xf32>
    %c0_18 = arith.constant 0 : index
    %c0_19 = arith.constant 0 : index
    %22 = vector.load %arg8[%c0_18, %c0_19] : memref<1x128xf32, #tpu.memory_space<vmem>>, vector<1x128xf32>
    %23 = vector.broadcast %22 : vector<1x128xf32> to vector<8x128xf32>
    %24 = arith.mulf %21, %23 : vector<8x128xf32>
    %cst_20 = arith.constant dense<0.000000e+00> : vector<8xf32>
    %25 = vector.multi_reduction <add>, %24, %cst_20 [1] : vector<8x128xf32> to vector<8xf32>
    %26 = vector.shape_cast %25 : vector<8xf32> to vector<8x1xf32>
    %c0_21 = arith.constant 0 : index
    %c0_22 = arith.constant 0 : index
    %27 = vector.load %arg9[%c0_21, %c0_22] : memref<1x1xf32, #tpu.memory_space<vmem>>, vector<1x1xf32>
    %28 = vector.broadcast %27 : vector<1x1xf32> to vector<8x1xf32>
    %29 = arith.addf %26, %28 : vector<8x1xf32>
    %30 = arith.negf %29 : vector<8x1xf32>
    %31 = math.exp %30 : vector<8x1xf32>
    %cst_23 = arith.constant 1.000000e+00 : f32
    %32 = vector.broadcast %cst_23 : f32 to vector<8x1xf32>
    %33 = arith.addf %32, %31 : vector<8x1xf32>
    %34 = arith.divf %32, %33 : vector<8x1xf32>
    %c0_24 = arith.constant 0 : index
    %c0_25 = arith.constant 0 : index
    %35 = vector.load %arg10[%c0_24, %c0_25] : memref<8x1xf32, #tpu.memory_space<vmem>>, vector<8x1xf32>
    tpu.vector_store %arg10[%c0_24, %c0_25], %34 {strides = array<i32>} : memref<8x1xf32, #tpu.memory_space<vmem>>, vector<8x1xf32>,
    return
  }
  func.func @transform_0(%arg0: i32) -> (i32, i32) {
    %c0_i32 = arith.constant 0 : i32
    %c0_i32_0 = arith.constant 0 : i32
    return %arg0, %c0_i32 : i32, i32
  }
  func.func @transform_1(%arg0: i32) -> (i32, i32) {
    %c0_i32 = arith.constant 0 : i32
    %c0_i32_0 = arith.constant 0 : i32
    %c0_i32_1 = arith.constant 0 : i32
    return %c0_i32, %c0_i32_0 : i32, i32
  }
  func.func @transform_2(%arg0: i32) -> (i32, i32) {
    %c0_i32 = arith.constant 0 : i32
    %c0_i32_0 = arith.constant 0 : i32
    %c0_i32_1 = arith.constant 0 : i32
    return %c0_i32, %c0_i32_0 : i32, i32
  }
  func.func @transform_3(%arg0: i32) -> (i32, i32) {
    %c0_i32 = arith.constant 0 : i32
    %c0_i32_0 = arith.constant 0 : i32
    %c0_i32_1 = arith.constant 0 : i32
    return %c0_i32, %c0_i32_0 : i32, i32
  }
  func.func @transform_4(%arg0: i32) -> (i32, i32) {
    %c0_i32 = arith.constant 0 : i32
    %c0_i32_0 = arith.constant 0 : i32
    %c0_i32_1 = arith.constant 0 : i32
    return %c0_i32, %c0_i32_0 : i32, i32
  }
  func.func @transform_5(%arg0: i32) -> (i32, i32) {
    %c0_i32 = arith.constant 0 : i32
    %c0_i32_0 = arith.constant 0 : i32
    %c0_i32_1 = arith.constant 0 : i32
    return %c0_i32, %c0_i32_0 : i32, i32
  }
  func.func @transform_6(%arg0: i32) -> (i32, i32) {
    %c0_i32 = arith.constant 0 : i32
    %c0_i32_0 = arith.constant 0 : i32
    %c0_i32_1 = arith.constant 0 : i32
    return %c0_i32, %c0_i32_0 : i32, i32
  }
  func.func @transform_7(%arg0: i32) -> (i32, i32) {
    %c0_i32 = arith.constant 0 : i32
    %c0_i32_0 = arith.constant 0 : i32
    %c0_i32_1 = arith.constant 0 : i32
    return %c0_i32, %c0_i32_0 : i32, i32
  }
  func.func @transform_8(%arg0: i32) -> (i32, i32) {
    %c0_i32 = arith.constant 0 : i32
    %c0_i32_0 = arith.constant 0 : i32
    %c0_i32_1 = arith.constant 0 : i32
    return %c0_i32, %c0_i32_0 : i32, i32
  }
  func.func @transform_9(%arg0: i32) -> (i32, i32) {
    %c0_i32 = arith.constant 0 : i32
    %c0_i32_0 = arith.constant 0 : i32
    return %arg0, %c0_i32 : i32, i32
  }
}

</mosaic_0001>

<llo_original>
// kernel: tpu_custom_call.1
$region0: #{tpu_custom_call.1}
  #allocation0 [shape = 'u32[]', space=smem, size = 0x4, offset = 0x4, fixed_abs, tag = 'smem constant byte address 0x4 - core index']
  #allocation1 [shape = 'u32[72,128]{1,0:T(1,128)}', space=vmem, size = 0x9000, scoped, tag = 'internal scratch']
  #allocation2 [shape = 'f32[1,1]{1,0:T(1,128)S(1)}', space=vmem, size = 0x200, scoped, tag = 'scoped memory for tpu_custom_call.1']
  %s0 = inlined_call_operand.hbm [shape: f32[8,1536], index: 0, kind: input, shape index: {}]
  %s1 = inlined_call_operand.hbm [shape: f32[1536,512], index: 1, kind: input, shape index: {}]
  %s2 = inlined_call_operand.hbm [shape: f32[1,512], index: 2, kind: input, shape index: {}]
  %s3 = inlined_call_operand.hbm [shape: f32[512,256], index: 3, kind: input, shape index: {}]
  %s4 = inlined_call_operand.hbm [shape: f32[1,256], index: 4, kind: input, shape index: {}]
  %s5 = inlined_call_operand.hbm [shape: f32[256,128], index: 5, kind: input, shape index: {}]
  %s6 = inlined_call_operand.hbm [shape: f32[1,128], index: 6, kind: input, shape index: {}]
  %s7 = inlined_call_operand.hbm [shape: f32[1,128], index: 7, kind: input, shape index: {}]
  %s8 = inlined_call_operand.<no memory space> [shape: f32[1,1], index: 8, kind: input, shape index: {}]
  %s9 = inlined_call_operand.vmem [shape: f32[8,1], index: 9, kind: output, shape index: {}]
  %s10 = sld [smem:[#allocation0]]
  $region78: #{tpu_custom_call.1} parent=0
    _
  %s12 = ssub.s32 1, %s10
  %s13 = scalar_select 0, %s12, %s10
  %v14 = vstv %s8
  %15 = vst [vmem:[#allocation2] sm:$0x1] %v14
  $region1: #{tpu_custom_call.1} parent=0
    #allocation3 [shape = 'u8[49152]{0}', space=vmem, size = 0xc000, scoped, tag = 'input window, operand 0, single buffered']
    #allocation4 [shape = 's32[1]{0}', space=sflag, size = 0x4, scoped, tag = 'scoped memory for tpu_custom_call.1']
    #allocation5 [shape = 'u8[3145728]{0}', space=vmem, size = 0x300000, scoped, tag = 'input window, operand 1, single buffered']
    #allocation6 [shape = 's32[1]{0}', space=sflag, size = 0x4, scoped, tag = 'scoped memory for tpu_custom_call.1']
    #allocation7 [shape = 'u8[2048]{0}', space=vmem, size = 0x800, scoped, tag = 'input window, operand 2, single buffered']
    #allocation8 [shape = 'u8[524288]{0}', space=vmem, size = 0x80000, scoped, tag = 'input window, operand 3, single buffered']
    #allocation9 [shape = 's32[1]{0}', space=sflag, size = 0x4, scoped, tag = 'scoped memory for tpu_custom_call.1']
    #allocation10 [shape = 'u8[1024]{0}', space=vmem, size = 0x400, scoped, tag = 'input window, operand 4, single buffered']
    #allocation11 [shape = 'u8[131072]{0}', space=vmem, size = 0x20000, scoped, tag = 'input window, operand 5, single buffered']
    #allocation12 [shape = 's32[1]{0}', space=sflag, size = 0x4, scoped, tag = 'scoped memory for tpu_custom_call.1']
    #allocation13 [shape = 'u8[512]{0}', space=vmem, size = 0x400, scoped, tag = 'input window, operand 6, single buffered']
    #allocation14 [shape = 'u8[512]{0}', space=vmem, size = 0x400, scoped, tag = 'input window, operand 7, single buffered']
    #allocation15 [shape = 's32[1]{0}', space=sflag, size = 0x4, scoped, tag = 'scoped memory for tpu_custom_call.1']
    %16 = vsyncpa [#allocation4], 0
    %17 = vsyncpa [#allocation6], 0
    %18 = vsyncpa [#allocation9], 0
    %19 = vsyncpa [#allocation12], 0
    %20 = vsyncpa [#allocation15], 0
    // Predicated region
    $region2: #{tpu_custom_call.1} parent=1 // pred_check
      _
    $region3: #{tpu_custom_call.1} parent=1 // pred_check_branch
      %22 = sbr.rel (0) target = $region5
    $region4: #{tpu_custom_call.1} parent=1 // pred_region
      %24 = vsyncadd [#allocation4], 0
      %s26 = sshll.u32 %s0, 4
      %s27 = int_to_ptr.hbm [resolvable:$true] %s26
      %s28 = sshll.u32 [#allocation3], 4
      %s29 = int_to_ptr.vmem [resolvable:$true] %s28
      %31 = dma.hbm_to_vmem [thread:$0]  %s27, 1536, %s29, [#allocation4]
    $region5: #{tpu_custom_call.1} parent=1 // pred_fallthru
      _
    // Predicated region
    $region6: #{tpu_custom_call.1} parent=1 // pred_check
      _
    $region7: #{tpu_custom_call.1} parent=1 // pred_check_branch
      %33 = sbr.rel (0) target = $region9
    $region8: #{tpu_custom_call.1} parent=1 // pred_region
      %35 = vsyncadd [#allocation6], 0
      %s36 = sshll.u32 %s1, 4
      %s37 = int_to_ptr.hbm [resolvable:$true] %s36
      %s38 = sshll.u32 [#allocation5], 4
      %s39 = int_to_ptr.vmem [resolvable:$true] %s38
      %44 = dma.hbm_to_vmem [thread:$0]  %s37, 98304, %s39, [#allocation6], 512, 512, 32
    $region9: #{tpu_custom_call.1} parent=1 // pred_fallthru
      _
    // Predicated region
    $region10: #{tpu_custom_call.1} parent=1 // pred_check
      _
    $region11: #{tpu_custom_call.1} parent=1 // pred_check_branch
      %46 = sbr.rel (0) target = $region13
    $region12: #{tpu_custom_call.1} parent=1 // pred_region
      %48 = vsyncadd [#allocation6], 0
      %s50 = sshll.u32 %s2, 4
      %s51 = int_to_ptr.hbm [resolvable:$true] %s50
      %s52 = sshll.u32 [#allocation7], 4
      %s53 = int_to_ptr.vmem [resolvable:$true] %s52
      %55 = dma.hbm_to_vmem [thread:$0]  %s51, 64, %s53, [#allocation6]
    $region13: #{tpu_custom_call.1} parent=1 // pred_fallthru
      _
    // Predicated region
    $region14: #{tpu_custom_call.1} parent=1 // pred_check
      _
    $region15: #{tpu_custom_call.1} parent=1 // pred_check_branch
      %57 = sbr.rel (0) target = $region17
    $region16: #{tpu_custom_call.1} parent=1 // pred_region
      %59 = vsyncadd [#allocation9], 0
      %s60 = sshll.u32 %s3, 4
      %s61 = int_to_ptr.hbm [resolvable:$true] %s60
      %s62 = sshll.u32 [#allocation8], 4
      %s63 = int_to_ptr.vmem [resolvable:$true] %s62
      %68 = dma.hbm_to_vmem [thread:$0]  %s61, 16384, %s63, [#allocation9], 256, 256, 16
    $region17: #{tpu_custom_call.1} parent=1 // pred_fallthru
      _
    // Predicated region
    $region18: #{tpu_custom_call.1} parent=1 // pred_check
      _
    $region19: #{tpu_custom_call.1} parent=1 // pred_check_branch
      %70 = sbr.rel (0) target = $region21
    $region20: #{tpu_custom_call.1} parent=1 // pred_region
      %72 = vsyncadd [#allocation9], 0
      %s74 = sshll.u32 %s4, 4
      %s75 = int_to_ptr.hbm [resolvable:$true] %s74
      %s76 = sshll.u32 [#allocation10], 4
      %s77 = int_to_ptr.vmem [resolvable:$true] %s76
      %79 = dma.hbm_to_vmem [thread:$0]  %s75, 32, %s77, [#allocation9]
    $region21: #{tpu_custom_call.1} parent=1 // pred_fallthru
      _
    // Predicated region
    $region22: #{tpu_custom_call.1} parent=1 // pred_check
      _
    $region23: #{tpu_custom_call.1} parent=1 // pred_check_branch
      %81 = sbr.rel (0) target = $region25
    $region24: #{tpu_custom_call.1} parent=1 // pred_region
      %83 = vsyncadd [#allocation12], 0
      %s84 = sshll.u32 %s5, 4
      %s85 = int_to_ptr.hbm [resolvable:$true] %s84
      %s86 = sshll.u32 [#allocation11], 4
      %s87 = int_to_ptr.vmem [resolvable:$true] %s86
      %92 = dma.hbm_to_vmem [thread:$0]  %s85, 4096, %s87, [#allocation12], 128, 128, 8
    $region25: #{tpu_custom_call.1} parent=1 // pred_fallthru
      _
    // Predicated region
    $region26: #{tpu_custom_call.1} parent=1 // pred_check
      _
    $region27: #{tpu_custom_call.1} parent=1 // pred_check_branch
      %94 = sbr.rel (0) target = $region29
    $region28: #{tpu_custom_call.1} parent=1 // pred_region
      %96 = vsyncadd [#allocation12], 0
      %s98 = sshll.u32 %s6, 4
      %s99 = int_to_ptr.hbm [resolvable:$true] %s98
      %s100 = sshll.u32 [#allocation13], 4
      %s101 = int_to_ptr.vmem [resolvable:$true] %s100
      %103 = dma.hbm_to_vmem [thread:$0]  %s99, 16, %s101, [#allocation12]
    $region29: #{tpu_custom_call.1} parent=1 // pred_fallthru
      _
    // Predicated region
    $region30: #{tpu_custom_call.1} parent=1 // pred_check
      _
    $region31: #{tpu_custom_call.1} parent=1 // pred_check_branch
      %105 = sbr.rel (0) target = $region33
    $region32: #{tpu_custom_call.1} parent=1 // pred_region
      %107 = vsyncadd [#allocation15], 0
      %s109 = sshll.u32 %s7, 4
      %s110 = int_to_ptr.hbm [resolvable:$true] %s109
      %s111 = sshll.u32 [#allocation14], 4
      %s112 = int_to_ptr.vmem [resolvable:$true] %s111
      %114 = dma.hbm_to_vmem [thread:$0]  %s110, 16, %s112, [#allocation15]
    $region33: #{tpu_custom_call.1} parent=1 // pred_fallthru
      _
    // Predicated region
    $region34: #{tpu_custom_call.1} parent=1 // pred_check
      _
    $region35: #{tpu_custom_call.1} parent=1 // pred_check_branch
      %116 = sbr.rel (0) target = $region37
    $region36: #{tpu_custom_call.1} parent=1 // pred_region
      _
    $region37: #{tpu_custom_call.1} parent=1 // pred_fallthru
      _
    // Predicated region
    $region38: #{tpu_custom_call.1} parent=1 // pred_check
      _
    $region39: #{tpu_custom_call.1} parent=1 // pred_check_branch
      %118 = sbr.rel (0) target = $region41
    $region40: #{tpu_custom_call.1} parent=1 // pred_region
      %120 = dma.done [#allocation4], 1536
    $region41: #{tpu_custom_call.1} parent=1 // pred_fallthru
      _
    // Predicated region
    $region42: #{tpu_custom_call.1} parent=1 // pred_check
      _
    $region43: #{tpu_custom_call.1} parent=1 // pred_check_branch
      %122 = sbr.rel (0) target = $region45
    $region44: #{tpu_custom_call.1} parent=1 // pred_region
      %124 = dma.done [#allocation6], 98304
    $region45: #{tpu_custom_call.1} parent=1 // pred_fallthru
      _
    // Predicated region
    $region46: #{tpu_custom_call.1} parent=1 // pred_check
      _
    $region47: #{tpu_custom_call.1} parent=1 // pred_check_branch
      %126 = sbr.rel (0) target = $region49
    $region48: #{tpu_custom_call.1} parent=1 // pred_region
      %128 = dma.done [#allocation6], 64
    $region49: #{tpu_custom_call.1} parent=1 // pred_fallthru
      _
    // Predicated region
    $region50: #{tpu_custom_call.1} parent=1 // pred_check
      _
    $region51: #{tpu_custom_call.1} parent=1 // pred_check_branch
      %130 = sbr.rel (0) target = $region53
    $region52: #{tpu_custom_call.1} parent=1 // pred_region
      %132 = dma.done [#allocation9], 16384
    $region53: #{tpu_custom_call.1} parent=1 // pred_fallthru
      _
    // Predicated region
    $region54: #{tpu_custom_call.1} parent=1 // pred_check
      _
    $region55: #{tpu_custom_call.1} parent=1 // pred_check_branch
      %134 = sbr.rel (0) target = $region57
    $region56: #{tpu_custom_call.1} parent=1 // pred_region
      %136 = dma.done [#allocation9], 32
    $region57: #{tpu_custom_call.1} parent=1 // pred_fallthru
      _
    // Predicated region
    $region58: #{tpu_custom_call.1} parent=1 // pred_check
      _
    $region59: #{tpu_custom_call.1} parent=1 // pred_check_branch
      %138 = sbr.rel (0) target = $region61
    $region60: #{tpu_custom_call.1} parent=1 // pred_region
      %140 = dma.done [#allocation12], 4096
    $region61: #{tpu_custom_call.1} parent=1 // pred_fallthru
      _
    // Predicated region
    $region62: #{tpu_custom_call.1} parent=1 // pred_check
      _
    $region63: #{tpu_custom_call.1} parent=1 // pred_check_branch
      %142 = sbr.rel (0) target = $region65
    $region64: #{tpu_custom_call.1} parent=1 // pred_region
      %144 = dma.done [#allocation12], 16
    $region65: #{tpu_custom_call.1} parent=1 // pred_fallthru
      _
    // Predicated region
    $region66: #{tpu_custom_call.1} parent=1 // pred_check
      _
    $region67: #{tpu_custom_call.1} parent=1 // pred_check_branch
      %146 = sbr.rel (0) target = $region69
    $region68: #{tpu_custom_call.1} parent=1 // pred_region
      %148 = dma.done [#allocation15], 16
    $region69: #{tpu_custom_call.1} parent=1 // pred_fallthru
      _
    %v149 = vld [vmem:[#allocation3] sm:$0xff]
    %v150 = vld [vmem:[#allocation3 + $0x8] sm:$0xff]
    %v151 = vld [vmem:[#allocation3 + $0x10] sm:$0xff]
    %v152 = vld [vmem:[#allocation3 + $0x18] sm:$0xff]
    %v153 = vld [vmem:[#allocation3 + $0x20] sm:$0xff]
    %v154 = vld [vmem:[#allocation3 + $0x28] sm:$0xff]
    %v155 = vld [vmem:[#allocation3 + $0x30] sm:$0xff]
    %v156 = vld [vmem:[#allocation3 + $0x38] sm:$0xff]
    %v157 = vld [vmem:[#allocation3 + $0x40] sm:$0xff]
    %v158 = vld [vmem:[#allocation3 + $0x48] sm:$0xff]
    %v159 = vld [vmem:[#allocation3 + $0x50] sm:$0xff]
    %v160 = vld [vmem:[#allocation3 + $0x58] sm:$0xff]
    %v161 = vld [vmem:[#allocation5] sm:$0xff]
    %v162 = vld [vmem:[#allocation5 + $0x8] sm:$0xff]
    %v163 = vld [vmem:[#allocation5 + $0x10] sm:$0xff]
    %v164 = vld [vmem:[#allocation5 + $0x18] sm:$0xff]
    %v165 = vld [vmem:[#allocation5 + $0x20] sm:$0xff]
    %v166 = vld [vmem:[#allocation5 + $0x28] sm:$0xff]
    %v167 = vld [vmem:[#allocation5 + $0x30] sm:$0xff]
    %v168 = vld [vmem:[#allocation5 + $0x38] sm:$0xff]
    %v169 = vld [vmem:[#allocation5 + $0x40] sm:$0xff]
    %v170 = vld [vmem:[#allocation5 + $0x48] sm:$0xff]
    %v171 = vld [vmem:[#allocation5 + $0x50] sm:$0xff]
    %v172 = vld [vmem:[#allocation5 + $0x58] sm:$0xff]
    %v173 = vld [vmem:[#allocation5 + $0x60] sm:$0xff]
    %v174 = vld [vmem:[#allocation5 + $0x68] sm:$0xff]
    %v175 = vld [vmem:[#allocation5 + $0x70] sm:$0xff]
    %v176 = vld [vmem:[#allocation5 + $0x78] sm:$0xff]
    %v177 = vld [vmem:[#allocation5 + $0x80] sm:$0xff]
    %v178 = vld [vmem:[#allocation5 + $0x88] sm:$0xff]
    %v179 = vld [vmem:[#allocation5 + $0x90] sm:$0xff]
    %v180 = vld [vmem:[#allocation5 + $0x98] sm:$0xff]
    %v181 = vld [vmem:[#allocation5 + $0xa0] sm:$0xff]
    %v182 = vld [vmem:[#allocation5 + $0xa8] sm:$0xff]
    %v183 = vld [vmem:[#allocation5 + $0xb0] sm:$0xff]
    %v184 = vld [vmem:[#allocation5 + $0xb8] sm:$0xff]
    %v185 = vld [vmem:[#allocation5 + $0xc0] sm:$0xff]
    %v186 = vld [vmem:[#allocation5 + $0xc8] sm:$0xff]
    %v187 = vld [vmem:[#allocation5 + $0xd0] sm:$0xff]
    %v188 = vld [vmem:[#allocation5 + $0xd8] sm:$0xff]
    %v189 = vld [vmem:[#allocation5 + $0xe0] sm:$0xff]
    %v190 = vld [vmem:[#allocation5 + $0xe8] sm:$0xff]
    %v191 = vld [vmem:[#allocation5 + $0xf0] sm:$0xff]
    %v192 = vld [vmem:[#allocation5 + $0xf8] sm:$0xff]
    %v193 = vld [vmem:[#allocation5 + $0x100] sm:$0xff]
    %v194 = vld [vmem:[#allocation5 + $0x108] sm:$0xff]
    %v195 = vld [vmem:[#allocation5 + $0x110] sm:$0xff]
    %v196 = vld [vmem:[#allocation5 + $0x118] sm:$0xff]
    %v197 = vld [vmem:[#allocation5 + $0x120] sm:$0xff]
    %v198 = vld [vmem:[#allocation5 + $0x128] sm:$0xff]
    %v199 = vld [vmem:[#allocation5 + $0x130] sm:$0xff]
    %v200 = vld [vmem:[#allocation5 + $0x138] sm:$0xff]
    %v201 = vld [vmem:[#allocation5 + $0x140] sm:$0xff]
    %v202 = vld [vmem:[#allocation5 + $0x148] sm:$0xff]
    %v203 = vld [vmem:[#allocation5 + $0x150] sm:$0xff]
    %v204 = vld [vmem:[#allocation5 + $0x158] sm:$0xff]
    %v205 = vld [vmem:[#allocation5 + $0x160] sm:$0xff]
    %v206 = vld [vmem:[#allocation5 + $0x168] sm:$0xff]
    %v207 = vld [vmem:[#allocation5 + $0x170] sm:$0xff]
    %v208 = vld [vmem:[#allocation5 + $0x178] sm:$0xff]
    %v209 = vld [vmem:[#allocation5 + $0x180] sm:$0xff]
    %v210 = vld [vmem:[#allocation5 + $0x188] sm:$0xff]
    %v211 = vld [vmem:[#allocation5 + $0x190] sm:$0xff]
    %v212 = vld [vmem:[#allocation5 + $0x198] sm:$0xff]
    %v213 = vld [vmem:[#allocation5 + $0x1a0] sm:$0xff]
    %v214 = vld [vmem:[#allocation5 + $0x1a8] sm:$0xff]
    %v215 = vld [vmem:[#allocation5 + $0x1b0] sm:$0xff]
    %v216 = vld [vmem:[#allocation5 + $0x1b8] sm:$0xff]
    %v217 = vld [vmem:[#allocation5 + $0x1c0] sm:$0xff]
    %v218 = vld [vmem:[#allocation5 + $0x1c8] sm:$0xff]
    %v219 = vld [vmem:[#allocation5 + $0x1d0] sm:$0xff]
    %v220 = vld [vmem:[#allocation5 + $0x1d8] sm:$0xff]
    %v221 = vld [vmem:[#allocation5 + $0x1e0] sm:$0xff]
    %v222 = vld [vmem:[#allocation5 + $0x1e8] sm:$0xff]
    %v223 = vld [vmem:[#allocation5 + $0x1f0] sm:$0xff]
    %v224 = vld [vmem:[#allocation5 + $0x1f8] sm:$0xff]
    %v225 = vld [vmem:[#allocation5 + $0x200] sm:$0xff]
    %v226 = vld [vmem:[#allocation5 + $0x208] sm:$0xff]
    %v227 = vld [vmem:[#allocation5 + $0x210] sm:$0xff]
    %v228 = vld [vmem:[#allocation5 + $0x218] sm:$0xff]
    %v229 = vld [vmem:[#allocation5 + $0x220] sm:$0xff]
    %v230 = vld [vmem:[#allocation5 + $0x228] sm:$0xff]
    %v231 = vld [vmem:[#allocation5 + $0x230] sm:$0xff]
    %v232 = vld [vmem:[#allocation5 + $0x238] sm:$0xff]
    %v233 = vld [vmem:[#allocation5 + $0x240] sm:$0xff]
    %v234 = vld [vmem:[#allocation5 + $0x248] sm:$0xff]
    %v235 = vld [vmem:[#allocation5 + $0x250] sm:$0xff]
    %v236 = vld [vmem:[#allocation5 + $0x258] sm:$0xff]
    %v237 = vld [vmem:[#allocation5 + $0x260] sm:$0xff]
    %v238 = vld [vmem:[#allocation5 + $0x268] sm:$0xff]
    %v239 = vld [vmem:[#allocation5 + $0x270] sm:$0xff]
    %v240 = vld [vmem:[#allocation5 + $0x278] sm:$0xff]
    %v241 = vld [vmem:[#allocation5 + $0x280] sm:$0xff]
    %v242 = vld [vmem:[#allocation5 + $0x288] sm:$0xff]
    %v243 = vld [vmem:[#allocation5 + $0x290] sm:$0xff]
    %v244 = vld [vmem:[#allocation5 + $0x298] sm:$0xff]
    %v245 = vld [vmem:[#allocation5 + $0x2a0] sm:$0xff]
    %v246 = vld [vmem:[#allocation5 + $0x2a8] sm:$0xff]
    %v247 = vld [vmem:[#allocation5 + $0x2b0] sm:$0xff]
    %v248 = vld [vmem:[#allocation5 + $0x2b8] sm:$0xff]
    %v249 = vld [vmem:[#allocation5 + $0x2c0] sm:$0xff]
    %v250 = vld [vmem:[#allocation5 + $0x2c8] sm:$0xff]
    %v251 = vld [vmem:[#allocation5 + $0x2d0] sm:$0xff]
    %v252 = vld [vmem:[#allocation5 + $0x2d8] sm:$0xff]
    %v253 = vld [vmem:[#allocation5 + $0x2e0] sm:$0xff]
    %v254 = vld [vmem:[#allocation5 + $0x2e8] sm:$0xff]
    %v255 = vld [vmem:[#allocation5 + $0x2f0] sm:$0xff]
    %v256 = vld [vmem:[#allocation5 + $0x2f8] sm:$0xff]
    %v257 = vld [vmem:[#allocation5 + $0x300] sm:$0xff]
    %v258 = vld [vmem:[#allocation5 + $0x308] sm:$0xff]
    %v259 = vld [vmem:[#allocation5 + $0x310] sm:$0xff]
    %v260 = vld [vmem:[#allocation5 + $0x318] sm:$0xff]
    %v261 = vld [vmem:[#allocation5 + $0x320] sm:$0xff]
    %v262 = vld [vmem:[#allocation5 + $0x328] sm:$0xff]
    %v263 = vld [vmem:[#allocation5 + $0x330] sm:$0xff]
    %v264 = vld [vmem:[#allocation5 + $0x338] sm:$0xff]
    %v265 = vld [vmem:[#allocation5 + $0x340] sm:$0xff]
    %v266 = vld [vmem:[#allocation5 + $0x348] sm:$0xff]
    %v267 = vld [vmem:[#allocation5 + $0x350] sm:$0xff]
    %v268 = vld [vmem:[#allocation5 + $0x358] sm:$0xff]
    %v269 = vld [vmem:[#allocation5 + $0x360] sm:$0xff]
    %v270 = vld [vmem:[#allocation5 + $0x368] sm:$0xff]
    %v271 = vld [vmem:[#allocation5 + $0x370] sm:$0xff]
    %v272 = vld [vmem:[#allocation5 + $0x378] sm:$0xff]
    %v273 = vld [vmem:[#allocation5 + $0x380] sm:$0xff]
    %v274 = vld [vmem:[#allocation5 + $0x388] sm:$0xff]
    %v275 = vld [vmem:[#allocation5 + $0x390] sm:$0xff]
    %v276 = vld [vmem:[#allocation5 + $0x398] sm:$0xff]
    %v277 = vld [vmem:[#allocation5 + $0x3a0] sm:$0xff]
    %v278 = vld [vmem:[#allocation5 + $0x3a8] sm:$0xff]
    %v279 = vld [vmem:[#allocation5 + $0x3b0] sm:$0xff]
    %v280 = vld [vmem:[#allocation5 + $0x3b8] sm:$0xff]
    %v281 = vld [vmem:[#allocation5 + $0x3c0] sm:$0xff]
    %v282 = vld [vmem:[#allocation5 + $0x3c8] sm:$0xff]
    %v283 = vld [vmem:[#allocation5 + $0x3d0] sm:$0xff]
    %v284 = vld [vmem:[#allocation5 + $0x3d8] sm:$0xff]
    %v285 = vld [vmem:[#allocation5 + $0x3e0] sm:$0xff]
    %v286 = vld [vmem:[#allocation5 + $0x3e8] sm:$0xff]
    %v287 = vld [vmem:[#allocation5 + $0x3f0] sm:$0xff]
    %v288 = vld [vmem:[#allocation5 + $0x3f8] sm:$0xff]
    %v289 = vld [vmem:[#allocation5 + $0x400] sm:$0xff]
    %v290 = vld [vmem:[#allocation5 + $0x408] sm:$0xff]
    %v291 = vld [vmem:[#allocation5 + $0x410] sm:$0xff]
    %v292 = vld [vmem:[#allocation5 + $0x418] sm:$0xff]
    %v293 = vld [vmem:[#allocation5 + $0x420] sm:$0xff]
    %v294 = vld [vmem:[#allocation5 + $0x428] sm:$0xff]
    %v295 = vld [vmem:[#allocation5 + $0x430] sm:$0xff]
    %v296 = vld [vmem:[#allocation5 + $0x438] sm:$0xff]
    %v297 = vld [vmem:[#allocation5 + $0x440] sm:$0xff]
    %v298 = vld [vmem:[#allocation5 + $0x448] sm:$0xff]
    %v299 = vld [vmem:[#allocation5 + $0x450] sm:$0xff]
    %v300 = vld [vmem:[#allocation5 + $0x458] sm:$0xff]
    %v301 = vld [vmem:[#allocation5 + $0x460] sm:$0xff]
    %v302 = vld [vmem:[#allocation5 + $0x468] sm:$0xff]
    %v303 = vld [vmem:[#allocation5 + $0x470] sm:$0xff]
    %v304 = vld [vmem:[#allocation5 + $0x478] sm:$0xff]
    %v305 = vld [vmem:[#allocation5 + $0x480] sm:$0xff]
    %v306 = vld [vmem:[#allocation5 + $0x488] sm:$0xff]
    %v307 = vld [vmem:[#allocation5 + $0x490] sm:$0xff]
    %v308 = vld [vmem:[#allocation5 + $0x498] sm:$0xff]
    %v309 = vld [vmem:[#allocation5 + $0x4a0] sm:$0xff]
    %v310 = vld [vmem:[#allocation5 + $0x4a8] sm:$0xff]
    %v311 = vld [vmem:[#allocation5 + $0x4b0] sm:$0xff]
    %v312 = vld [vmem:[#allocation5 + $0x4b8] sm:$0xff]
    %v313 = vld [vmem:[#allocation5 + $0x4c0] sm:$0xff]
    %v314 = vld [vmem:[#allocation5 + $0x4c8] sm:$0xff]
    %v315 = vld [vmem:[#allocation5 + $0x4d0] sm:$0xff]
    %v316 = vld [vmem:[#allocation5 + $0x4d8] sm:$0xff]
    %v317 = vld [vmem:[#allocation5 + $0x4e0] sm:$0xff]
    %v318 = vld [vmem:[#allocation5 + $0x4e8] sm:$0xff]
    %v319 = vld [vmem:[#allocation5 + $0x4f0] sm:$0xff]
    %v320 = vld [vmem:[#allocation5 + $0x4f8] sm:$0xff]
    %v321 = vld [vmem:[#allocation5 + $0x500] sm:$0xff]
    %v322 = vld [vmem:[#allocation5 + $0x508] sm:$0xff]
    %v323 = vld [vmem:[#allocation5 + $0x510] sm:$0xff]
    %v324 = vld [vmem:[#allocation5 + $0x518] sm:$0xff]
    %v325 = vld [vmem:[#allocation5 + $0x520] sm:$0xff]
    %v326 = vld [vmem:[#allocation5 + $0x528] sm:$0xff]
    %v327 = vld [vmem:[#allocation5 + $0x530] sm:$0xff]
    %v328 = vld [vmem:[#allocation5 + $0x538] sm:$0xff]
    %v329 = vld [vmem:[#allocation5 + $0x540] sm:$0xff]
    %v330 = vld [vmem:[#allocation5 + $0x548] sm:$0xff]
    %v331 = vld [vmem:[#allocation5 + $0x550] sm:$0xff]
    %v332 = vld [vmem:[#allocation5 + $0x558] sm:$0xff]
    %v333 = vld [vmem:[#allocation5 + $0x560] sm:$0xff]
    %v334 = vld [vmem:[#allocation5 + $0x568] sm:$0xff]
    %v335 = vld [vmem:[#allocation5 + $0x570] sm:$0xff]
    %v336 = vld [vmem:[#allocation5 + $0x578] sm:$0xff]
    %v337 = vld [vmem:[#allocation5 + $0x580] sm:$0xff]
    %v338 = vld [vmem:[#allocation5 + $0x588] sm:$0xff]
    %v339 = vld [vmem:[#allocation5 + $0x590] sm:$0xff]
    %v340 = vld [vmem:[#allocation5 + $0x598] sm:$0xff]
    %v341 = vld [vmem:[#allocation5 + $0x5a0] sm:$0xff]
    %v342 = vld [vmem:[#allocation5 + $0x5a8] sm:$0xff]
    %v343 = vld [vmem:[#allocation5 + $0x5b0] sm:$0xff]
    %v344 = vld [vmem:[#allocation5 + $0x5b8] sm:$0xff]
    %v345 = vld [vmem:[#allocation5 + $0x5c0] sm:$0xff]
    %v346 = vld [vmem:[#allocation5 + $0x5c8] sm:$0xff]
    %v347 = vld [vmem:[#allocation5 + $0x5d0] sm:$0xff]
    %v348 = vld [vmem:[#allocation5 + $0x5d8] sm:$0xff]
    %v349 = vld [vmem:[#allocation5 + $0x5e0] sm:$0xff]
    %v350 = vld [vmem:[#allocation5 + $0x5e8] sm:$0xff]
    %v351 = vld [vmem:[#allocation5 + $0x5f0] sm:$0xff]
    %v352 = vld [vmem:[#allocation5 + $0x5f8] sm:$0xff]
    %v353 = vld [vmem:[#allocation5 + $0x600] sm:$0xff]
    %v354 = vld [vmem:[#allocation5 + $0x608] sm:$0xff]
    %v355 = vld [vmem:[#allocation5 + $0x610] sm:$0xff]
    %v356 = vld [vmem:[#allocation5 + $0x618] sm:$0xff]
    %v357 = vld [vmem:[#allocation5 + $0x620] sm:$0xff]
    %v358 = vld [vmem:[#allocation5 + $0x628] sm:$0xff]
    %v359 = vld [vmem:[#allocation5 + $0x630] sm:$0xff]
    %v360 = vld [vmem:[#allocation5 + $0x638] sm:$0xff]
    %v361 = vld [vmem:[#allocation5 + $0x640] sm:$0xff]
    %v362 = vld [vmem:[#allocation5 + $0x648] sm:$0xff]
    %v363 = vld [vmem:[#allocation5 + $0x650] sm:$0xff]
    %v364 = vld [vmem:[#allocation5 + $0x658] sm:$0xff]
    %v365 = vld [vmem:[#allocation5 + $0x660] sm:$0xff]
    %v366 = vld [vmem:[#allocation5 + $0x668] sm:$0xff]
    %v367 = vld [vmem:[#allocation5 + $0x670] sm:$0xff]
    %v368 = vld [vmem:[#allocation5 + $0x678] sm:$0xff]
    %v369 = vld [vmem:[#allocation5 + $0x680] sm:$0xff]
    %v370 = vld [vmem:[#allocation5 + $0x688] sm:$0xff]
    %v371 = vld [vmem:[#allocation5 + $0x690] sm:$0xff]
    %v372 = vld [vmem:[#allocation5 + $0x698] sm:$0xff]
    %v373 = vld [vmem:[#allocation5 + $0x6a0] sm:$0xff]
    %v374 = vld [vmem:[#allocation5 + $0x6a8] sm:$0xff]
    %v375 = vld [vmem:[#allocation5 + $0x6b0] sm:$0xff]
    %v376 = vld [vmem:[#allocation5 + $0x6b8] sm:$0xff]
    %v377 = vld [vmem:[#allocation5 + $0x6c0] sm:$0xff]
    %v378 = vld [vmem:[#allocation5 + $0x6c8] sm:$0xff]
    %v379 = vld [vmem:[#allocation5 + $0x6d0] sm:$0xff]
    %v380 = vld [vmem:[#allocation5 + $0x6d8] sm:$0xff]
    %v381 = vld [vmem:[#allocation5 + $0x6e0] sm:$0xff]
    %v382 = vld [vmem:[#allocation5 + $0x6e8] sm:$0xff]
    %v383 = vld [vmem:[#allocation5 + $0x6f0] sm:$0xff]
    %v384 = vld [vmem:[#allocation5 + $0x6f8] sm:$0xff]
    %v385 = vld [vmem:[#allocation5 + $0x700] sm:$0xff]
    %v386 = vld [vmem:[#allocation5 + $0x708] sm:$0xff]
    %v387 = vld [vmem:[#allocation5 + $0x710] sm:$0xff]
    %v388 = vld [vmem:[#allocation5 + $0x718] sm:$0xff]
    %v389 = vld [vmem:[#allocation5 + $0x720] sm:$0xff]
    %v390 = vld [vmem:[#allocation5 + $0x728] sm:$0xff]
    %v391 = vld [vmem:[#allocation5 + $0x730] sm:$0xff]
    %v392 = vld [vmem:[#allocation5 + $0x738] sm:$0xff]
    %v393 = vld [vmem:[#allocation5 + $0x740] sm:$0xff]
    %v394 = vld [vmem:[#allocation5 + $0x748] sm:$0xff]
    %v395 = vld [vmem:[#allocation5 + $0x750] sm:$0xff]
    %v396 = vld [vmem:[#allocation5 + $0x758] sm:$0xff]
    %v397 = vld [vmem:[#allocation5 + $0x760] sm:$0xff]
    %v398 = vld [vmem:[#allocation5 + $0x768] sm:$0xff]
    %v399 = vld [vmem:[#allocation5 + $0x770] sm:$0xff]
    %v400 = vld [vmem:[#allocation5 + $0x778] sm:$0xff]
    %v401 = vld [vmem:[#allocation5 + $0x780] sm:$0xff]
    %v402 = vld [vmem:[#allocation5 + $0x788] sm:$0xff]
    %v403 = vld [vmem:[#allocation5 + $0x790] sm:$0xff]
    %v404 = vld [vmem:[#allocation5 + $0x798] sm:$0xff]
    %v405 = vld [vmem:[#allocation5 + $0x7a0] sm:$0xff]
    %v406 = vld [vmem:[#allocation5 + $0x7a8] sm:$0xff]
    %v407 = vld [vmem:[#allocation5 + $0x7b0] sm:$0xff]
    %v408 = vld [vmem:[#allocation5 + $0x7b8] sm:$0xff]
    %v409 = vld [vmem:[#allocation5 + $0x7c0] sm:$0xff]
    %v410 = vld [vmem:[#allocation5 + $0x7c8] sm:$0xff]
    %v411 = vld [vmem:[#allocation5 + $0x7d0] sm:$0xff]
    %v412 = vld [vmem:[#allocation5 + $0x7d8] sm:$0xff]
    %v413 = vld [vmem:[#allocation5 + $0x7e0] sm:$0xff]
    %v414 = vld [vmem:[#allocation5 + $0x7e8] sm:$0xff]
    %v415 = vld [vmem:[#allocation5 + $0x7f0] sm:$0xff]
    %v416 = vld [vmem:[#allocation5 + $0x7f8] sm:$0xff]
    %v417 = vld [vmem:[#allocation5 + $0x800] sm:$0xff]
    %v418 = vld [vmem:[#allocation5 + $0x808] sm:$0xff]
    %v419 = vld [vmem:[#allocation5 + $0x810] sm:$0xff]
    %v420 = vld [vmem:[#allocation5 + $0x818] sm:$0xff]
    %v421 = vld [vmem:[#allocation5 + $0x820] sm:$0xff]
    %v422 = vld [vmem:[#allocation5 + $0x828] sm:$0xff]
    %v423 = vld [vmem:[#allocation5 + $0x830] sm:$0xff]
    %v424 = vld [vmem:[#allocation5 + $0x838] sm:$0xff]
    %v425 = vld [vmem:[#allocation5 + $0x840] sm:$0xff]
    %v426 = vld [vmem:[#allocation5 + $0x848] sm:$0xff]
    %v427 = vld [vmem:[#allocation5 + $0x850] sm:$0xff]
    %v428 = vld [vmem:[#allocation5 + $0x858] sm:$0xff]
    %v429 = vld [vmem:[#allocation5 + $0x860] sm:$0xff]
    %v430 = vld [vmem:[#allocation5 + $0x868] sm:$0xff]
    %v431 = vld [vmem:[#allocation5 + $0x870] sm:$0xff]
    %v432 = vld [vmem:[#allocation5 + $0x878] sm:$0xff]
    %v433 = vld [vmem:[#allocation5 + $0x880] sm:$0xff]
    %v434 = vld [vmem:[#allocation5 + $0x888] sm:$0xff]
    %v435 = vld [vmem:[#allocation5 + $0x890] sm:$0xff]
    %v436 = vld [vmem:[#allocation5 + $0x898] sm:$0xff]
    %v437 = vld [vmem:[#allocation5 + $0x8a0] sm:$0xff]
    %v438 = vld [vmem:[#allocation5 + $0x8a8] sm:$0xff]
    %v439 = vld [vmem:[#allocation5 + $0x8b0] sm:$0xff]
    %v440 = vld [vmem:[#allocation5 + $0x8b8] sm:$0xff]
    %v441 = vld [vmem:[#allocation5 + $0x8c0] sm:$0xff]
    %v442 = vld [vmem:[#allocation5 + $0x8c8] sm:$0xff]
    %v443 = vld [vmem:[#allocation5 + $0x8d0] sm:$0xff]
    %v444 = vld [vmem:[#allocation5 + $0x8d8] sm:$0xff]
    %v445 = vld [vmem:[#allocation5 + $0x8e0] sm:$0xff]
    %v446 = vld [vmem:[#allocation5 + $0x8e8] sm:$0xff]
    %v447 = vld [vmem:[#allocation5 + $0x8f0] sm:$0xff]
    %v448 = vld [vmem:[#allocation5 + $0x8f8] sm:$0xff]
    %v449 = vld [vmem:[#allocation5 + $0x900] sm:$0xff]
    %v450 = vld [vmem:[#allocation5 + $0x908] sm:$0xff]
    %v451 = vld [vmem:[#allocation5 + $0x910] sm:$0xff]
    %v452 = vld [vmem:[#allocation5 + $0x918] sm:$0xff]
    %v453 = vld [vmem:[#allocation5 + $0x920] sm:$0xff]
    %v454 = vld [vmem:[#allocation5 + $0x928] sm:$0xff]
    %v455 = vld [vmem:[#allocation5 + $0x930] sm:$0xff]
    %v456 = vld [vmem:[#allocation5 + $0x938] sm:$0xff]
    %v457 = vld [vmem:[#allocation5 + $0x940] sm:$0xff]
    %v458 = vld [vmem:[#allocation5 + $0x948] sm:$0xff]
    %v459 = vld [vmem:[#allocation5 + $0x950] sm:$0xff]
    %v460 = vld [vmem:[#allocation5 + $0x958] sm:$0xff]
    %v461 = vld [vmem:[#allocation5 + $0x960] sm:$0xff]
    %v462 = vld [vmem:[#allocation5 + $0x968] sm:$0xff]
    %v463 = vld [vmem:[#allocation5 + $0x970] sm:$0xff]
    %v464 = vld [vmem:[#allocation5 + $0x978] sm:$0xff]
    %v465 = vld [vmem:[#allocation5 + $0x980] sm:$0xff]
    %v466 = vld [vmem:[#allocation5 + $0x988] sm:$0xff]
    %v467 = vld [vmem:[#allocation5 + $0x990] sm:$0xff]
    %v468 = vld [vmem:[#allocation5 + $0x998] sm:$0xff]
    %v469 = vld [vmem:[#allocation5 + $0x9a0] sm:$0xff]
    %v470 = vld [vmem:[#allocation5 + $0x9a8] sm:$0xff]
    %v471 = vld [vmem:[#allocation5 + $0x9b0] sm:$0xff]
    %v472 = vld [vmem:[#allocation5 + $0x9b8] sm:$0xff]
    %v473 = vld [vmem:[#allocation5 + $0x9c0] sm:$0xff]
    %v474 = vld [vmem:[#allocation5 + $0x9c8] sm:$0xff]
    %v475 = vld [vmem:[#allocation5 + $0x9d0] sm:$0xff]
    %v476 = vld [vmem:[#allocation5 + $0x9d8] sm:$0xff]
    %v477 = vld [vmem:[#allocation5 + $0x9e0] sm:$0xff]
    %v478 = vld [vmem:[#allocation5 + $0x9e8] sm:$0xff]
    %v479 = vld [vmem:[#allocation5 + $0x9f0] sm:$0xff]
    %v480 = vld [vmem:[#allocation5 + $0x9f8] sm:$0xff]
    %v481 = vld [vmem:[#allocation5 + $0xa00] sm:$0xff]
    %v482 = vld [vmem:[#allocation5 + $0xa08] sm:$0xff]
    %v483 = vld [vmem:[#allocation5 + $0xa10] sm:$0xff]
    %v484 = vld [vmem:[#allocation5 + $0xa18] sm:$0xff]
    %v485 = vld [vmem:[#allocation5 + $0xa20] sm:$0xff]
    %v486 = vld [vmem:[#allocation5 + $0xa28] sm:$0xff]
    %v487 = vld [vmem:[#allocation5 + $0xa30] sm:$0xff]
    %v488 = vld [vmem:[#allocation5 + $0xa38] sm:$0xff]
    %v489 = vld [vmem:[#allocation5 + $0xa40] sm:$0xff]
    %v490 = vld [vmem:[#allocation5 + $0xa48] sm:$0xff]
    %v491 = vld [vmem:[#allocation5 + $0xa50] sm:$0xff]
    %v492 = vld [vmem:[#allocation5 + $0xa58] sm:$0xff]
    %v493 = vld [vmem:[#allocation5 + $0xa60] sm:$0xff]
    %v494 = vld [vmem:[#allocation5 + $0xa68] sm:$0xff]
    %v495 = vld [vmem:[#allocation5 + $0xa70] sm:$0xff]
    %v496 = vld [vmem:[#allocation5 + $0xa78] sm:$0xff]
    %v497 = vld [vmem:[#allocation5 + $0xa80] sm:$0xff]
    %v498 = vld [vmem:[#allocation5 + $0xa88] sm:$0xff]
    %v499 = vld [vmem:[#allocation5 + $0xa90] sm:$0xff]
    %v500 = vld [vmem:[#allocation5 + $0xa98] sm:$0xff]
    %v501 = vld [vmem:[#allocation5 + $0xaa0] sm:$0xff]
    %v502 = vld [vmem:[#allocation5 + $0xaa8] sm:$0xff]
    %v503 = vld [vmem:[#allocation5 + $0xab0] sm:$0xff]
    %v504 = vld [vmem:[#allocation5 + $0xab8] sm:$0xff]
    %v505 = vld [vmem:[#allocation5 + $0xac0] sm:$0xff]
    %v506 = vld [vmem:[#allocation5 + $0xac8] sm:$0xff]
    %v507 = vld [vmem:[#allocation5 + $0xad0] sm:$0xff]
    %v508 = vld [vmem:[#allocation5 + $0xad8] sm:$0xff]
    %v509 = vld [vmem:[#allocation5 + $0xae0] sm:$0xff]
    %v510 = vld [vmem:[#allocation5 + $0xae8] sm:$0xff]
    %v511 = vld [vmem:[#allocation5 + $0xaf0] sm:$0xff]
    %v512 = vld [vmem:[#allocation5 + $0xaf8] sm:$0xff]
    %v513 = vld [vmem:[#allocation5 + $0xb00] sm:$0xff]
    %v514 = vld [vmem:[#allocation5 + $0xb08] sm:$0xff]
    %v515 = vld [vmem:[#allocation5 + $0xb10] sm:$0xff]
    %v516 = vld [vmem:[#allocation5 + $0xb18] sm:$0xff]
    %v517 = vld [vmem:[#allocation5 + $0xb20] sm:$0xff]
    %v518 = vld [vmem:[#allocation5 + $0xb28] sm:$0xff]
    %v519 = vld [vmem:[#allocation5 + $0xb30] sm:$0xff]
    %v520 = vld [vmem:[#allocation5 + $0xb38] sm:$0xff]
    %v521 = vld [vmem:[#allocation5 + $0xb40] sm:$0xff]
    %v522 = vld [vmem:[#allocation5 + $0xb48] sm:$0xff]
    %v523 = vld [vmem:[#allocation5 + $0xb50] sm:$0xff]
    %v524 = vld [vmem:[#allocation5 + $0xb58] sm:$0xff]
    %v525 = vld [vmem:[#allocation5 + $0xb60] sm:$0xff]
    %v526 = vld [vmem:[#allocation5 + $0xb68] sm:$0xff]
    %v527 = vld [vmem:[#allocation5 + $0xb70] sm:$0xff]
    %v528 = vld [vmem:[#allocation5 + $0xb78] sm:$0xff]
    %v529 = vld [vmem:[#allocation5 + $0xb80] sm:$0xff]
    %v530 = vld [vmem:[#allocation5 + $0xb88] sm:$0xff]
    %v531 = vld [vmem:[#allocation5 + $0xb90] sm:$0xff]
    %v532 = vld [vmem:[#allocation5 + $0xb98] sm:$0xff]
    %v533 = vld [vmem:[#allocation5 + $0xba0] sm:$0xff]
    %v534 = vld [vmem:[#allocation5 + $0xba8] sm:$0xff]
    %v535 = vld [vmem:[#allocation5 + $0xbb0] sm:$0xff]
    %v536 = vld [vmem:[#allocation5 + $0xbb8] sm:$0xff]
    %v537 = vld [vmem:[#allocation5 + $0xbc0] sm:$0xff]
    %v538 = vld [vmem:[#allocation5 + $0xbc8] sm:$0xff]
    %v539 = vld [vmem:[#allocation5 + $0xbd0] sm:$0xff]
    %v540 = vld [vmem:[#allocation5 + $0xbd8] sm:$0xff]
    %v541 = vld [vmem:[#allocation5 + $0xbe0] sm:$0xff]
    %v542 = vld [vmem:[#allocation5 + $0xbe8] sm:$0xff]
    %v543 = vld [vmem:[#allocation5 + $0xbf0] sm:$0xff]
    %v544 = vld [vmem:[#allocation5 + $0xbf8] sm:$0xff]
    %v545 = vld [vmem:[#allocation5 + $0xc00] sm:$0xff]
    %v546 = vld [vmem:[#allocation5 + $0xc08] sm:$0xff]
    %v547 = vld [vmem:[#allocation5 + $0xc10] sm:$0xff]
    %v548 = vld [vmem:[#allocation5 + $0xc18] sm:$0xff]
    %v549 = vld [vmem:[#allocation5 + $0xc20] sm:$0xff]
    %v550 = vld [vmem:[#allocation5 + $0xc28] sm:$0xff]
    %v551 = vld [vmem:[#allocation5 + $0xc30] sm:$0xff]
    %v552 = vld [vmem:[#allocation5 + $0xc38] sm:$0xff]
    %v553 = vld [vmem:[#allocation5 + $0xc40] sm:$0xff]
    %v554 = vld [vmem:[#allocation5 + $0xc48] sm:$0xff]
    %v555 = vld [vmem:[#allocation5 + $0xc50] sm:$0xff]
    %v556 = vld [vmem:[#allocation5 + $0xc58] sm:$0xff]
    %v557 = vld [vmem:[#allocation5 + $0xc60] sm:$0xff]
    %v558 = vld [vmem:[#allocation5 + $0xc68] sm:$0xff]
    %v559 = vld [vmem:[#allocation5 + $0xc70] sm:$0xff]
    %v560 = vld [vmem:[#allocation5 + $0xc78] sm:$0xff]
    %v561 = vld [vmem:[#allocation5 + $0xc80] sm:$0xff]
    %v562 = vld [vmem:[#allocation5 + $0xc88] sm:$0xff]
    %v563 = vld [vmem:[#allocation5 + $0xc90] sm:$0xff]
    %v564 = vld [vmem:[#allocation5 + $0xc98] sm:$0xff]
    %v565 = vld [vmem:[#allocation5 + $0xca0] sm:$0xff]
    %v566 = vld [vmem:[#allocation5 + $0xca8] sm:$0xff]
    %v567 = vld [vmem:[#allocation5 + $0xcb0] sm:$0xff]
    %v568 = vld [vmem:[#allocation5 + $0xcb8] sm:$0xff]
    %v569 = vld [vmem:[#allocation5 + $0xcc0] sm:$0xff]
    %v570 = vld [vmem:[#allocation5 + $0xcc8] sm:$0xff]
    %v571 = vld [vmem:[#allocation5 + $0xcd0] sm:$0xff]
    %v572 = vld [vmem:[#allocation5 + $0xcd8] sm:$0xff]
    %v573 = vld [vmem:[#allocation5 + $0xce0] sm:$0xff]
    %v574 = vld [vmem:[#allocation5 + $0xce8] sm:$0xff]
    %v575 = vld [vmem:[#allocation5 + $0xcf0] sm:$0xff]
    %v576 = vld [vmem:[#allocation5 + $0xcf8] sm:$0xff]
    %v577 = vld [vmem:[#allocation5 + $0xd00] sm:$0xff]
    %v578 = vld [vmem:[#allocation5 + $0xd08] sm:$0xff]
    %v579 = vld [vmem:[#allocation5 + $0xd10] sm:$0xff]
    %v580 = vld [vmem:[#allocation5 + $0xd18] sm:$0xff]
    %v581 = vld [vmem:[#allocation5 + $0xd20] sm:$0xff]
    %v582 = vld [vmem:[#allocation5 + $0xd28] sm:$0xff]
    %v583 = vld [vmem:[#allocation5 + $0xd30] sm:$0xff]
    %v584 = vld [vmem:[#allocation5 + $0xd38] sm:$0xff]
    %v585 = vld [vmem:[#allocation5 + $0xd40] sm:$0xff]
    %v586 = vld [vmem:[#allocation5 + $0xd48] sm:$0xff]
    %v587 = vld [vmem:[#allocation5 + $0xd50] sm:$0xff]
    %v588 = vld [vmem:[#allocation5 + $0xd58] sm:$0xff]
    %v589 = vld [vmem:[#allocation5 + $0xd60] sm:$0xff]
    %v590 = vld [vmem:[#allocation5 + $0xd68] sm:$0xff]
    %v591 = vld [vmem:[#allocation5 + $0xd70] sm:$0xff]
    %v592 = vld [vmem:[#allocation5 + $0xd78] sm:$0xff]
    %v593 = vld [vmem:[#allocation5 + $0xd80] sm:$0xff]
    %v594 = vld [vmem:[#allocation5 + $0xd88] sm:$0xff]
    %v595 = vld [vmem:[#allocation5 + $0xd90] sm:$0xff]
    %v596 = vld [vmem:[#allocation5 + $0xd98] sm:$0xff]
    %v597 = vld [vmem:[#allocation5 + $0xda0] sm:$0xff]
    %v598 = vld [vmem:[#allocation5 + $0xda8] sm:$0xff]
    %v599 = vld [vmem:[#allocation5 + $0xdb0] sm:$0xff]
    %v600 = vld [vmem:[#allocation5 + $0xdb8] sm:$0xff]
    %v601 = vld [vmem:[#allocation5 + $0xdc0] sm:$0xff]
    %v602 = vld [vmem:[#allocation5 + $0xdc8] sm:$0xff]
    %v603 = vld [vmem:[#allocation5 + $0xdd0] sm:$0xff]
    %v604 = vld [vmem:[#allocation5 + $0xdd8] sm:$0xff]
    %v605 = vld [vmem:[#allocation5 + $0xde0] sm:$0xff]
    %v606 = vld [vmem:[#allocation5 + $0xde8] sm:$0xff]
    %v607 = vld [vmem:[#allocation5 + $0xdf0] sm:$0xff]
    %v608 = vld [vmem:[#allocation5 + $0xdf8] sm:$0xff]
    %v609 = vld [vmem:[#allocation5 + $0xe00] sm:$0xff]
    %v610 = vld [vmem:[#allocation5 + $0xe08] sm:$0xff]
    %v611 = vld [vmem:[#allocation5 + $0xe10] sm:$0xff]
    %v612 = vld [vmem:[#allocation5 + $0xe18] sm:$0xff]
    %v613 = vld [vmem:[#allocation5 + $0xe20] sm:$0xff]
    %v614 = vld [vmem:[#allocation5 + $0xe28] sm:$0xff]
    %v615 = vld [vmem:[#allocation5 + $0xe30] sm:$0xff]
    %v616 = vld [vmem:[#allocation5 + $0xe38] sm:$0xff]
    %v617 = vld [vmem:[#allocation5 + $0xe40] sm:$0xff]
    %v618 = vld [vmem:[#allocation5 + $0xe48] sm:$0xff]
    %v619 = vld [vmem:[#allocation5 + $0xe50] sm:$0xff]
    %v620 = vld [vmem:[#allocation5 + $0xe58] sm:$0xff]
    %v621 = vld [vmem:[#allocation5 + $0xe60] sm:$0xff]
    %v622 = vld [vmem:[#allocation5 + $0xe68] sm:$0xff]
    %v623 = vld [vmem:[#allocation5 + $0xe70] sm:$0xff]
    %v624 = vld [vmem:[#allocation5 + $0xe78] sm:$0xff]
    %v625 = vld [vmem:[#allocation5 + $0xe80] sm:$0xff]
    %v626 = vld [vmem:[#allocation5 + $0xe88] sm:$0xff]
    %v627 = vld [vmem:[#allocation5 + $0xe90] sm:$0xff]
    %v628 = vld [vmem:[#allocation5 + $0xe98] sm:$0xff]
    %v629 = vld [vmem:[#allocation5 + $0xea0] sm:$0xff]
    %v630 = vld [vmem:[#allocation5 + $0xea8] sm:$0xff]
    %v631 = vld [vmem:[#allocation5 + $0xeb0] sm:$0xff]
    %v632 = vld [vmem:[#allocation5 + $0xeb8] sm:$0xff]
    %v633 = vld [vmem:[#allocation5 + $0xec0] sm:$0xff]
    %v634 = vld [vmem:[#allocation5 + $0xec8] sm:$0xff]
    %v635 = vld [vmem:[#allocation5 + $0xed0] sm:$0xff]
    %v636 = vld [vmem:[#allocation5 + $0xed8] sm:$0xff]
    %v637 = vld [vmem:[#allocation5 + $0xee0] sm:$0xff]
    %v638 = vld [vmem:[#allocation5 + $0xee8] sm:$0xff]
    %v639 = vld [vmem:[#allocation5 + $0xef0] sm:$0xff]
    %v640 = vld [vmem:[#allocation5 + $0xef8] sm:$0xff]
    %v641 = vld [vmem:[#allocation5 + $0xf00] sm:$0xff]
    %v642 = vld [vmem:[#allocation5 + $0xf08] sm:$0xff]
    %v643 = vld [vmem:[#allocation5 + $0xf10] sm:$0xff]
    %v644 = vld [vmem:[#allocation5 + $0xf18] sm:$0xff]
    %v645 = vld [vmem:[#allocation5 + $0xf20] sm:$0xff]
    %v646 = vld [vmem:[#allocation5 + $0xf28] sm:$0xff]
    %v647 = vld [vmem:[#allocation5 + $0xf30] sm:$0xff]
    %v648 = vld [vmem:[#allocation5 + $0xf38] sm:$0xff]
    %v649 = vld [vmem:[#allocation5 + $0xf40] sm:$0xff]
    %v650 = vld [vmem:[#allocation5 + $0xf48] sm:$0xff]
    %v651 = vld [vmem:[#allocation5 + $0xf50] sm:$0xff]
    %v652 = vld [vmem:[#allocation5 + $0xf58] sm:$0xff]
    %v653 = vld [vmem:[#allocation5 + $0xf60] sm:$0xff]
    %v654 = vld [vmem:[#allocation5 + $0xf68] sm:$0xff]
    %v655 = vld [vmem:[#allocation5 + $0xf70] sm:$0xff]
    %v656 = vld [vmem:[#allocation5 + $0xf78] sm:$0xff]
    %v657 = vld [vmem:[#allocation5 + $0xf80] sm:$0xff]
    %v658 = vld [vmem:[#allocation5 + $0xf88] sm:$0xff]
    %v659 = vld [vmem:[#allocation5 + $0xf90] sm:$0xff]
    %v660 = vld [vmem:[#allocation5 + $0xf98] sm:$0xff]
    %v661 = vld [vmem:[#allocation5 + $0xfa0] sm:$0xff]
    %v662 = vld [vmem:[#allocation5 + $0xfa8] sm:$0xff]
    %v663 = vld [vmem:[#allocation5 + $0xfb0] sm:$0xff]
    %v664 = vld [vmem:[#allocation5 + $0xfb8] sm:$0xff]
    %v665 = vld [vmem:[#allocation5 + $0xfc0] sm:$0xff]
    %v666 = vld [vmem:[#allocation5 + $0xfc8] sm:$0xff]
    %v667 = vld [vmem:[#allocation5 + $0xfd0] sm:$0xff]
    %v668 = vld [vmem:[#allocation5 + $0xfd8] sm:$0xff]
    %v669 = vld [vmem:[#allocation5 + $0xfe0] sm:$0xff]
    %v670 = vld [vmem:[#allocation5 + $0xfe8] sm:$0xff]
    %v671 = vld [vmem:[#allocation5 + $0xff0] sm:$0xff]
    %v672 = vld [vmem:[#allocation5 + $0xff8] sm:$0xff]
    %v673 = vld [vmem:[#allocation5 + $0x1000] sm:$0xff]
    %v674 = vld [vmem:[#allocation5 + $0x1008] sm:$0xff]
    %v675 = vld [vmem:[#allocation5 + $0x1010] sm:$0xff]
    %v676 = vld [vmem:[#allocation5 + $0x1018] sm:$0xff]
    %v677 = vld [vmem:[#allocation5 + $0x1020] sm:$0xff]
    %v678 = vld [vmem:[#allocation5 + $0x1028] sm:$0xff]
    %v679 = vld [vmem:[#allocation5 + $0x1030] sm:$0xff]
    %v680 = vld [vmem:[#allocation5 + $0x1038] sm:$0xff]
    %v681 = vld [vmem:[#allocation5 + $0x1040] sm:$0xff]
    %v682 = vld [vmem:[#allocation5 + $0x1048] sm:$0xff]
    %v683 = vld [vmem:[#allocation5 + $0x1050] sm:$0xff]
    %v684 = vld [vmem:[#allocation5 + $0x1058] sm:$0xff]
    %v685 = vld [vmem:[#allocation5 + $0x1060] sm:$0xff]
    %v686 = vld [vmem:[#allocation5 + $0x1068] sm:$0xff]
    %v687 = vld [vmem:[#allocation5 + $0x1070] sm:$0xff]
    %v688 = vld [vmem:[#allocation5 + $0x1078] sm:$0xff]
    %v689 = vld [vmem:[#allocation5 + $0x1080] sm:$0xff]
    %v690 = vld [vmem:[#allocation5 + $0x1088] sm:$0xff]
    %v691 = vld [vmem:[#allocation5 + $0x1090] sm:$0xff]
    %v692 = vld [vmem:[#allocation5 + $0x1098] sm:$0xff]
    %v693 = vld [vmem:[#allocation5 + $0x10a0] sm:$0xff]
    %v694 = vld [vmem:[#allocation5 + $0x10a8] sm:$0xff]
    %v695 = vld [vmem:[#allocation5 + $0x10b0] sm:$0xff]
    %v696 = vld [vmem:[#allocation5 + $0x10b8] sm:$0xff]
    %v697 = vld [vmem:[#allocation5 + $0x10c0] sm:$0xff]
    %v698 = vld [vmem:[#allocation5 + $0x10c8] sm:$0xff]
    %v699 = vld [vmem:[#allocation5 + $0x10d0] sm:$0xff]
    %v700 = vld [vmem:[#allocation5 + $0x10d8] sm:$0xff]
    %v701 = vld [vmem:[#allocation5 + $0x10e0] sm:$0xff]
    %v702 = vld [vmem:[#allocation5 + $0x10e8] sm:$0xff]
    %v703 = vld [vmem:[#allocation5 + $0x10f0] sm:$0xff]
    %v704 = vld [vmem:[#allocation5 + $0x10f8] sm:$0xff]
    %v705 = vld [vmem:[#allocation5 + $0x1100] sm:$0xff]
    %v706 = vld [vmem:[#allocation5 + $0x1108] sm:$0xff]
    %v707 = vld [vmem:[#allocation5 + $0x1110] sm:$0xff]
    %v708 = vld [vmem:[#allocation5 + $0x1118] sm:$0xff]
    %v709 = vld [vmem:[#allocation5 + $0x1120] sm:$0xff]
    %v710 = vld [vmem:[#allocation5 + $0x1128] sm:$0xff]
    %v711 = vld [vmem:[#allocation5 + $0x1130] sm:$0xff]
    %v712 = vld [vmem:[#allocation5 + $0x1138] sm:$0xff]
    %v713 = vld [vmem:[#allocation5 + $0x1140] sm:$0xff]
    %v714 = vld [vmem:[#allocation5 + $0x1148] sm:$0xff]
    %v715 = vld [vmem:[#allocation5 + $0x1150] sm:$0xff]
    %v716 = vld [vmem:[#allocation5 + $0x1158] sm:$0xff]
    %v717 = vld [vmem:[#allocation5 + $0x1160] sm:$0xff]
    %v718 = vld [vmem:[#allocation5 + $0x1168] sm:$0xff]
    %v719 = vld [vmem:[#allocation5 + $0x1170] sm:$0xff]
    %v720 = vld [vmem:[#allocation5 + $0x1178] sm:$0xff]
    %v721 = vld [vmem:[#allocation5 + $0x1180] sm:$0xff]
    %v722 = vld [vmem:[#allocation5 + $0x1188] sm:$0xff]
    %v723 = vld [vmem:[#allocation5 + $0x1190] sm:$0xff]
    %v724 = vld [vmem:[#allocation5 + $0x1198] sm:$0xff]
    %v725 = vld [vmem:[#allocation5 + $0x11a0] sm:$0xff]
    %v726 = vld [vmem:[#allocation5 + $0x11a8] sm:$0xff]
    %v727 = vld [vmem:[#allocation5 + $0x11b0] sm:$0xff]
    %v728 = vld [vmem:[#allocation5 + $0x11b8] sm:$0xff]
    %v729 = vld [vmem:[#allocation5 + $0x11c0] sm:$0xff]
    %v730 = vld [vmem:[#allocation5 + $0x11c8] sm:$0xff]
    %v731 = vld [vmem:[#allocation5 + $0x11d0] sm:$0xff]
    %v732 = vld [vmem:[#allocation5 + $0x11d8] sm:$0xff]
    %v733 = vld [vmem:[#allocation5 + $0x11e0] sm:$0xff]
    %v734 = vld [vmem:[#allocation5 + $0x11e8] sm:$0xff]
    %v735 = vld [vmem:[#allocation5 + $0x11f0] sm:$0xff]
    %v736 = vld [vmem:[#allocation5 + $0x11f8] sm:$0xff]
    %v737 = vld [vmem:[#allocation5 + $0x1200] sm:$0xff]
    %v738 = vld [vmem:[#allocation5 + $0x1208] sm:$0xff]
    %v739 = vld [vmem:[#allocation5 + $0x1210] sm:$0xff]
    %v740 = vld [vmem:[#allocation5 + $0x1218] sm:$0xff]
    %v741 = vld [vmem:[#allocation5 + $0x1220] sm:$0xff]
    %v742 = vld [vmem:[#allocation5 + $0x1228] sm:$0xff]
    %v743 = vld [vmem:[#allocation5 + $0x1230] sm:$0xff]
    %v744 = vld [vmem:[#allocation5 + $0x1238] sm:$0xff]
    %v745 = vld [vmem:[#allocation5 + $0x1240] sm:$0xff]
    %v746 = vld [vmem:[#allocation5 + $0x1248] sm:$0xff]
    %v747 = vld [vmem:[#allocation5 + $0x1250] sm:$0xff]
    %v748 = vld [vmem:[#allocation5 + $0x1258] sm:$0xff]
    %v749 = vld [vmem:[#allocation5 + $0x1260] sm:$0xff]
    %v750 = vld [vmem:[#allocation5 + $0x1268] sm:$0xff]
    %v751 = vld [vmem:[#allocation5 + $0x1270] sm:$0xff]
    %v752 = vld [vmem:[#allocation5 + $0x1278] sm:$0xff]
    %v753 = vld [vmem:[#allocation5 + $0x1280] sm:$0xff]
    %v754 = vld [vmem:[#allocation5 + $0x1288] sm:$0xff]
    %v755 = vld [vmem:[#allocation5 + $0x1290] sm:$0xff]
    %v756 = vld [vmem:[#allocation5 + $0x1298] sm:$0xff]
    %v757 = vld [vmem:[#allocation5 + $0x12a0] sm:$0xff]
    %v758 = vld [vmem:[#allocation5 + $0x12a8] sm:$0xff]
    %v759 = vld [vmem:[#allocation5 + $0x12b0] sm:$0xff]
    %v760 = vld [vmem:[#allocation5 + $0x12b8] sm:$0xff]
    %v761 = vld [vmem:[#allocation5 + $0x12c0] sm:$0xff]
    %v762 = vld [vmem:[#allocation5 + $0x12c8] sm:$0xff]
    %v763 = vld [vmem:[#allocation5 + $0x12d0] sm:$0xff]
    %v764 = vld [vmem:[#allocation5 + $0x12d8] sm:$0xff]
    %v765 = vld [vmem:[#allocation5 + $0x12e0] sm:$0xff]
    %v766 = vld [vmem:[#allocation5 + $0x12e8] sm:$0xff]
    %v767 = vld [vmem:[#allocation5 + $0x12f0] sm:$0xff]
    %v768 = vld [vmem:[#allocation5 + $0x12f8] sm:$0xff]
    %v769 = vld [vmem:[#allocation5 + $0x1300] sm:$0xff]
    %v770 = vld [vmem:[#allocation5 + $0x1308] sm:$0xff]
    %v771 = vld [vmem:[#allocation5 + $0x1310] sm:$0xff]
    %v772 = vld [vmem:[#allocation5 + $0x1318] sm:$0xff]
    %v773 = vld [vmem:[#allocation5 + $0x1320] sm:$0xff]
    %v774 = vld [vmem:[#allocation5 + $0x1328] sm:$0xff]
    %v775 = vld [vmem:[#allocation5 + $0x1330] sm:$0xff]
    %v776 = vld [vmem:[#allocation5 + $0x1338] sm:$0xff]
    %v777 = vld [vmem:[#allocation5 + $0x1340] sm:$0xff]
    %v778 = vld [vmem:[#allocation5 + $0x1348] sm:$0xff]
    %v779 = vld [vmem:[#allocation5 + $0x1350] sm:$0xff]
    %v780 = vld [vmem:[#allocation5 + $0x1358] sm:$0xff]
    %v781 = vld [vmem:[#allocation5 + $0x1360] sm:$0xff]
    %v782 = vld [vmem:[#allocation5 + $0x1368] sm:$0xff]
    %v783 = vld [vmem:[#allocation5 + $0x1370] sm:$0xff]
    %v784 = vld [vmem:[#allocation5 + $0x1378] sm:$0xff]
    %v785 = vld [vmem:[#allocation5 + $0x1380] sm:$0xff]
    %v786 = vld [vmem:[#allocation5 + $0x1388] sm:$0xff]
    %v787 = vld [vmem:[#allocation5 + $0x1390] sm:$0xff]
    %v788 = vld [vmem:[#allocation5 + $0x1398] sm:$0xff]
    %v789 = vld [vmem:[#allocation5 + $0x13a0] sm:$0xff]
    %v790 = vld [vmem:[#allocation5 + $0x13a8] sm:$0xff]
    %v791 = vld [vmem:[#allocation5 + $0x13b0] sm:$0xff]
    %v792 = vld [vmem:[#allocation5 + $0x13b8] sm:$0xff]
    %v793 = vld [vmem:[#allocation5 + $0x13c0] sm:$0xff]
    %v794 = vld [vmem:[#allocation5 + $0x13c8] sm:$0xff]
    %v795 = vld [vmem:[#allocation5 + $0x13d0] sm:$0xff]
    %v796 = vld [vmem:[#allocation5 + $0x13d8] sm:$0xff]
    %v797 = vld [vmem:[#allocation5 + $0x13e0] sm:$0xff]
    %v798 = vld [vmem:[#allocation5 + $0x13e8] sm:$0xff]
    %v799 = vld [vmem:[#allocation5 + $0x13f0] sm:$0xff]
    %v800 = vld [vmem:[#allocation5 + $0x13f8] sm:$0xff]
    %v801 = vld [vmem:[#allocation5 + $0x1400] sm:$0xff]
    %v802 = vld [vmem:[#allocation5 + $0x1408] sm:$0xff]
    %v803 = vld [vmem:[#allocation5 + $0x1410] sm:$0xff]
    %v804 = vld [vmem:[#allocation5 + $0x1418] sm:$0xff]
    %v805 = vld [vmem:[#allocation5 + $0x1420] sm:$0xff]
    %v806 = vld [vmem:[#allocation5 + $0x1428] sm:$0xff]
    %v807 = vld [vmem:[#allocation5 + $0x1430] sm:$0xff]
    %v808 = vld [vmem:[#allocation5 + $0x1438] sm:$0xff]
    %v809 = vld [vmem:[#allocation5 + $0x1440] sm:$0xff]
    %v810 = vld [vmem:[#allocation5 + $0x1448] sm:$0xff]
    %v811 = vld [vmem:[#allocation5 + $0x1450] sm:$0xff]
    %v812 = vld [vmem:[#allocation5 + $0x1458] sm:$0xff]
    %v813 = vld [vmem:[#allocation5 + $0x1460] sm:$0xff]
    %v814 = vld [vmem:[#allocation5 + $0x1468] sm:$0xff]
    %v815 = vld [vmem:[#allocation5 + $0x1470] sm:$0xff]
    %v816 = vld [vmem:[#allocation5 + $0x1478] sm:$0xff]
    %v817 = vld [vmem:[#allocation5 + $0x1480] sm:$0xff]
    %v818 = vld [vmem:[#allocation5 + $0x1488] sm:$0xff]
    %v819 = vld [vmem:[#allocation5 + $0x1490] sm:$0xff]
    %v820 = vld [vmem:[#allocation5 + $0x1498] sm:$0xff]
    %v821 = vld [vmem:[#allocation5 + $0x14a0] sm:$0xff]
    %v822 = vld [vmem:[#allocation5 + $0x14a8] sm:$0xff]
    %v823 = vld [vmem:[#allocation5 + $0x14b0] sm:$0xff]
    %v824 = vld [vmem:[#allocation5 + $0x14b8] sm:$0xff]
    %v825 = vld [vmem:[#allocation5 + $0x14c0] sm:$0xff]
    %v826 = vld [vmem:[#allocation5 + $0x14c8] sm:$0xff]
    %v827 = vld [vmem:[#allocation5 + $0x14d0] sm:$0xff]
    %v828 = vld [vmem:[#allocation5 + $0x14d8] sm:$0xff]
    %v829 = vld [vmem:[#allocation5 + $0x14e0] sm:$0xff]
    %v830 = vld [vmem:[#allocation5 + $0x14e8] sm:$0xff]
    %v831 = vld [vmem:[#allocation5 + $0x14f0] sm:$0xff]
    %v832 = vld [vmem:[#allocation5 + $0x14f8] sm:$0xff]
    %v833 = vld [vmem:[#allocation5 + $0x1500] sm:$0xff]
    %v834 = vld [vmem:[#allocation5 + $0x1508] sm:$0xff]
    %v835 = vld [vmem:[#allocation5 + $0x1510] sm:$0xff]
    %v836 = vld [vmem:[#allocation5 + $0x1518] sm:$0xff]
    %v837 = vld [vmem:[#allocation5 + $0x1520] sm:$0xff]
    %v838 = vld [vmem:[#allocation5 + $0x1528] sm:$0xff]
    %v839 = vld [vmem:[#allocation5 + $0x1530] sm:$0xff]
    %v840 = vld [vmem:[#allocation5 + $0x1538] sm:$0xff]
    %v841 = vld [vmem:[#allocation5 + $0x1540] sm:$0xff]
    %v842 = vld [vmem:[#allocation5 + $0x1548] sm:$0xff]
    %v843 = vld [vmem:[#allocation5 + $0x1550] sm:$0xff]
    %v844 = vld [vmem:[#allocation5 + $0x1558] sm:$0xff]
    %v845 = vld [vmem:[#allocation5 + $0x1560] sm:$0xff]
    %v846 = vld [vmem:[#allocation5 + $0x1568] sm:$0xff]
    %v847 = vld [vmem:[#allocation5 + $0x1570] sm:$0xff]
    %v848 = vld [vmem:[#allocation5 + $0x1578] sm:$0xff]
    %v849 = vld [vmem:[#allocation5 + $0x1580] sm:$0xff]
    %v850 = vld [vmem:[#allocation5 + $0x1588] sm:$0xff]
    %v851 = vld [vmem:[#allocation5 + $0x1590] sm:$0xff]
    %v852 = vld [vmem:[#allocation5 + $0x1598] sm:$0xff]
    %v853 = vld [vmem:[#allocation5 + $0x15a0] sm:$0xff]
    %v854 = vld [vmem:[#allocation5 + $0x15a8] sm:$0xff]
    %v855 = vld [vmem:[#allocation5 + $0x15b0] sm:$0xff]
    %v856 = vld [vmem:[#allocation5 + $0x15b8] sm:$0xff]
    %v857 = vld [vmem:[#allocation5 + $0x15c0] sm:$0xff]
    %v858 = vld [vmem:[#allocation5 + $0x15c8] sm:$0xff]
    %v859 = vld [vmem:[#allocation5 + $0x15d0] sm:$0xff]
    %v860 = vld [vmem:[#allocation5 + $0x15d8] sm:$0xff]
    %v861 = vld [vmem:[#allocation5 + $0x15e0] sm:$0xff]
    %v862 = vld [vmem:[#allocation5 + $0x15e8] sm:$0xff]
    %v863 = vld [vmem:[#allocation5 + $0x15f0] sm:$0xff]
    %v864 = vld [vmem:[#allocation5 + $0x15f8] sm:$0xff]
    %v865 = vld [vmem:[#allocation5 + $0x1600] sm:$0xff]
    %v866 = vld [vmem:[#allocation5 + $0x1608] sm:$0xff]
    %v867 = vld [vmem:[#allocation5 + $0x1610] sm:$0xff]
    %v868 = vld [vmem:[#allocation5 + $0x1618] sm:$0xff]
    %v869 = vld [vmem:[#allocation5 + $0x1620] sm:$0xff]
    %v870 = vld [vmem:[#allocation5 + $0x1628] sm:$0xff]
    %v871 = vld [vmem:[#allocation5 + $0x1630] sm:$0xff]
    %v872 = vld [vmem:[#allocation5 + $0x1638] sm:$0xff]
    %v873 = vld [vmem:[#allocation5 + $0x1640] sm:$0xff]
    %v874 = vld [vmem:[#allocation5 + $0x1648] sm:$0xff]
    %v875 = vld [vmem:[#allocation5 + $0x1650] sm:$0xff]
    %v876 = vld [vmem:[#allocation5 + $0x1658] sm:$0xff]
    %v877 = vld [vmem:[#allocation5 + $0x1660] sm:$0xff]
    %v878 = vld [vmem:[#allocation5 + $0x1668] sm:$0xff]
    %v879 = vld [vmem:[#allocation5 + $0x1670] sm:$0xff]
    %v880 = vld [vmem:[#allocation5 + $0x1678] sm:$0xff]
    %v881 = vld [vmem:[#allocation5 + $0x1680] sm:$0xff]
    %v882 = vld [vmem:[#allocation5 + $0x1688] sm:$0xff]
    %v883 = vld [vmem:[#allocation5 + $0x1690] sm:$0xff]
    %v884 = vld [vmem:[#allocation5 + $0x1698] sm:$0xff]
    %v885 = vld [vmem:[#allocation5 + $0x16a0] sm:$0xff]
    %v886 = vld [vmem:[#allocation5 + $0x16a8] sm:$0xff]
    %v887 = vld [vmem:[#allocation5 + $0x16b0] sm:$0xff]
    %v888 = vld [vmem:[#allocation5 + $0x16b8] sm:$0xff]
    %v889 = vld [vmem:[#allocation5 + $0x16c0] sm:$0xff]
    %v890 = vld [vmem:[#allocation5 + $0x16c8] sm:$0xff]
    %v891 = vld [vmem:[#allocation5 + $0x16d0] sm:$0xff]
    %v892 = vld [vmem:[#allocation5 + $0x16d8] sm:$0xff]
    %v893 = vld [vmem:[#allocation5 + $0x16e0] sm:$0xff]
    %v894 = vld [vmem:[#allocation5 + $0x16e8] sm:$0xff]
    %v895 = vld [vmem:[#allocation5 + $0x16f0] sm:$0xff]
    %v896 = vld [vmem:[#allocation5 + $0x16f8] sm:$0xff]
    %v897 = vld [vmem:[#allocation5 + $0x1700] sm:$0xff]
    %v898 = vld [vmem:[#allocation5 + $0x1708] sm:$0xff]
    %v899 = vld [vmem:[#allocation5 + $0x1710] sm:$0xff]
    %v900 = vld [vmem:[#allocation5 + $0x1718] sm:$0xff]
    %v901 = vld [vmem:[#allocation5 + $0x1720] sm:$0xff]
    %v902 = vld [vmem:[#allocation5 + $0x1728] sm:$0xff]
    %v903 = vld [vmem:[#allocation5 + $0x1730] sm:$0xff]
    %v904 = vld [vmem:[#allocation5 + $0x1738] sm:$0xff]
    %v905 = vld [vmem:[#allocation5 + $0x1740] sm:$0xff]
    %v906 = vld [vmem:[#allocation5 + $0x1748] sm:$0xff]
    %v907 = vld [vmem:[#allocation5 + $0x1750] sm:$0xff]
    %v908 = vld [vmem:[#allocation5 + $0x1758] sm:$0xff]
    %v909 = vld [vmem:[#allocation5 + $0x1760] sm:$0xff]
    %v910 = vld [vmem:[#allocation5 + $0x1768] sm:$0xff]
    %v911 = vld [vmem:[#allocation5 + $0x1770] sm:$0xff]
    %v912 = vld [vmem:[#allocation5 + $0x1778] sm:$0xff]
    %v913 = vld [vmem:[#allocation5 + $0x1780] sm:$0xff]
    %v914 = vld [vmem:[#allocation5 + $0x1788] sm:$0xff]
    %v915 = vld [vmem:[#allocation5 + $0x1790] sm:$0xff]
    %v916 = vld [vmem:[#allocation5 + $0x1798] sm:$0xff]
    %v917 = vld [vmem:[#allocation5 + $0x17a0] sm:$0xff]
    %v918 = vld [vmem:[#allocation5 + $0x17a8] sm:$0xff]
    %v919 = vld [vmem:[#allocation5 + $0x17b0] sm:$0xff]
    %v920 = vld [vmem:[#allocation5 + $0x17b8] sm:$0xff]
    %v921 = vld [vmem:[#allocation5 + $0x17c0] sm:$0xff]
    %v922 = vld [vmem:[#allocation5 + $0x17c8] sm:$0xff]
    %v923 = vld [vmem:[#allocation5 + $0x17d0] sm:$0xff]
    %v924 = vld [vmem:[#allocation5 + $0x17d8] sm:$0xff]
    %v925 = vld [vmem:[#allocation5 + $0x17e0] sm:$0xff]
    %v926 = vld [vmem:[#allocation5 + $0x17e8] sm:$0xff]
    %v927 = vld [vmem:[#allocation5 + $0x17f0] sm:$0xff]
    %v928 = vld [vmem:[#allocation5 + $0x17f8] sm:$0xff]
    %v929 = vld [vmem:[#allocation7] sm:$0xf]
    %v931 = vperm.slane %v929, 0
    %v932 = vperm.slane %v929, 1
    %v933 = vperm.slane %v929, 2
    %v934 = vperm.slane %v929, 3
    %939 = vmatpush.msra.mxu0 %v221
    %940 = vmatpush.msra.mxu0 %v217
    %941 = vmatpush.msra.mxu0 %v213
    %942 = vmatpush.msra.mxu0 %v209
    %943 = vmatpush.msra.mxu0 %v205
    %944 = vmatpush.msra.mxu0 %v201
    %945 = vmatpush.msra.mxu0 %v197
    %946 = vmatpush.msra.mxu0 %v193
    %947 = vmatpush.msra.mxu0 %v189
    %948 = vmatpush.msra.mxu0 %v185
    %949 = vmatpush.msra.mxu0 %v181
    %950 = vmatpush.msra.mxu0 %v177
    %951 = vmatpush.msra.mxu0 %v173
    %952 = vmatpush.msra.mxu0 %v169
    %953 = vmatpush.msra.mxu0 %v165
    %954 = vmatpush.msra.mxu0 %v161
    %955 = vmatmul.f32.gmra.mxu0 %v149
    %v956 = vpop.f32.mrf.mxu0
    %v957 = vadd.f32 %v931, %v956
    %958 = vdwg.mxu0
    %959 = vmatpush.msra.mxu0 %v285
    %960 = vmatpush.msra.mxu0 %v281
    %961 = vmatpush.msra.mxu0 %v277
    %962 = vmatpush.msra.mxu0 %v273
    %963 = vmatpush.msra.mxu0 %v269
    %964 = vmatpush.msra.mxu0 %v265
    %965 = vmatpush.msra.mxu0 %v261
    %966 = vmatpush.msra.mxu0 %v257
    %967 = vmatpush.msra.mxu0 %v253
    %968 = vmatpush.msra.mxu0 %v249
    %969 = vmatpush.msra.mxu0 %v245
    %970 = vmatpush.msra.mxu0 %v241
    %971 = vmatpush.msra.mxu0 %v237
    %972 = vmatpush.msra.mxu0 %v233
    %973 = vmatpush.msra.mxu0 %v229
    %974 = vmatpush.msra.mxu0 %v225
    %975 = vmatmul.f32.gmra.mxu0 %v150
    %v976 = vpop.f32.mrf.mxu0
    %v977 = vadd.f32 %v957, %v976
    %978 = vdwg.mxu0
    %979 = vmatpush.msra.mxu0 %v349
    %980 = vmatpush.msra.mxu0 %v345
    %981 = vmatpush.msra.mxu0 %v341
    %982 = vmatpush.msra.mxu0 %v337
    %983 = vmatpush.msra.mxu0 %v333
    %984 = vmatpush.msra.mxu0 %v329
    %985 = vmatpush.msra.mxu0 %v325
    %986 = vmatpush.msra.mxu0 %v321
    %987 = vmatpush.msra.mxu0 %v317
    %988 = vmatpush.msra.mxu0 %v313
    %989 = vmatpush.msra.mxu0 %v309
    %990 = vmatpush.msra.mxu0 %v305
    %991 = vmatpush.msra.mxu0 %v301
    %992 = vmatpush.msra.mxu0 %v297
    %993 = vmatpush.msra.mxu0 %v293
    %994 = vmatpush.msra.mxu0 %v289
    %995 = vmatmul.f32.gmra.mxu0 %v151
    %v996 = vpop.f32.mrf.mxu0
    %v997 = vadd.f32 %v977, %v996
    %998 = vdwg.mxu0
    %999 = vmatpush.msra.mxu0 %v413
    %1000 = vmatpush.msra.mxu0 %v409
    %1001 = vmatpush.msra.mxu0 %v405
    %1002 = vmatpush.msra.mxu0 %v401
    %1003 = vmatpush.msra.mxu0 %v397
    %1004 = vmatpush.msra.mxu0 %v393
    %1005 = vmatpush.msra.mxu0 %v389
    %1006 = vmatpush.msra.mxu0 %v385
    %1007 = vmatpush.msra.mxu0 %v381
    %1008 = vmatpush.msra.mxu0 %v377
    %1009 = vmatpush.msra.mxu0 %v373
    %1010 = vmatpush.msra.mxu0 %v369
    %1011 = vmatpush.msra.mxu0 %v365
    %1012 = vmatpush.msra.mxu0 %v361
    %1013 = vmatpush.msra.mxu0 %v357
    %1014 = vmatpush.msra.mxu0 %v353
    %1015 = vmatmul.f32.gmra.mxu0 %v152
    %v1016 = vpop.f32.mrf.mxu0
    %v1017 = vadd.f32 %v997, %v1016
    %1018 = vdwg.mxu0
    %1019 = vmatpush.msra.mxu0 %v477
    %1020 = vmatpush.msra.mxu0 %v473
    %1021 = vmatpush.msra.mxu0 %v469
    %1022 = vmatpush.msra.mxu0 %v465
    %1023 = vmatpush.msra.mxu0 %v461
    %1024 = vmatpush.msra.mxu0 %v457
    %1025 = vmatpush.msra.mxu0 %v453
    %1026 = vmatpush.msra.mxu0 %v449
    %1027 = vmatpush.msra.mxu0 %v445
    %1028 = vmatpush.msra.mxu0 %v441
    %1029 = vmatpush.msra.mxu0 %v437
    %1030 = vmatpush.msra.mxu0 %v433
    %1031 = vmatpush.msra.mxu0 %v429
    %1032 = vmatpush.msra.mxu0 %v425
    %1033 = vmatpush.msra.mxu0 %v421
    %1034 = vmatpush.msra.mxu0 %v417
    %1035 = vmatmul.f32.gmra.mxu0 %v153
    %v1036 = vpop.f32.mrf.mxu0
    %v1037 = vadd.f32 %v1017, %v1036
    %1038 = vdwg.mxu0
    %1039 = vmatpush.msra.mxu0 %v541
    %1040 = vmatpush.msra.mxu0 %v537
    %1041 = vmatpush.msra.mxu0 %v533
    %1042 = vmatpush.msra.mxu0 %v529
    %1043 = vmatpush.msra.mxu0 %v525
    %1044 = vmatpush.msra.mxu0 %v521
    %1045 = vmatpush.msra.mxu0 %v517
    %1046 = vmatpush.msra.mxu0 %v513
    %1047 = vmatpush.msra.mxu0 %v509
    %1048 = vmatpush.msra.mxu0 %v505
    %1049 = vmatpush.msra.mxu0 %v501
    %1050 = vmatpush.msra.mxu0 %v497
    %1051 = vmatpush.msra.mxu0 %v493
    %1052 = vmatpush.msra.mxu0 %v489
    %1053 = vmatpush.msra.mxu0 %v485
    %1054 = vmatpush.msra.mxu0 %v481
    %1055 = vmatmul.f32.gmra.mxu0 %v154
    %v1056 = vpop.f32.mrf.mxu0
    %v1057 = vadd.f32 %v1037, %v1056
    %1058 = vdwg.mxu0
    %1059 = vmatpush.msra.mxu0 %v605
    %1060 = vmatpush.msra.mxu0 %v601
    %1061 = vmatpush.msra.mxu0 %v597
    %1062 = vmatpush.msra.mxu0 %v593
    %1063 = vmatpush.msra.mxu0 %v589
    %1064 = vmatpush.msra.mxu0 %v585
    %1065 = vmatpush.msra.mxu0 %v581
    %1066 = vmatpush.msra.mxu0 %v577
    %1067 = vmatpush.msra.mxu0 %v573
    %1068 = vmatpush.msra.mxu0 %v569
    %1069 = vmatpush.msra.mxu0 %v565
    %1070 = vmatpush.msra.mxu0 %v561
    %1071 = vmatpush.msra.mxu0 %v557
    %1072 = vmatpush.msra.mxu0 %v553
    %1073 = vmatpush.msra.mxu0 %v549
    %1074 = vmatpush.msra.mxu0 %v545
    %1075 = vmatmul.f32.gmra.mxu0 %v155
    %v1076 = vpop.f32.mrf.mxu0
    %v1077 = vadd.f32 %v1057, %v1076
    %1078 = vdwg.mxu0
    %1079 = vmatpush.msra.mxu0 %v669
    %1080 = vmatpush.msra.mxu0 %v665
    %1081 = vmatpush.msra.mxu0 %v661
    %1082 = vmatpush.msra.mxu0 %v657
    %1083 = vmatpush.msra.mxu0 %v653
    %1084 = vmatpush.msra.mxu0 %v649
    %1085 = vmatpush.msra.mxu0 %v645
    %1086 = vmatpush.msra.mxu0 %v641
    %1087 = vmatpush.msra.mxu0 %v637
    %1088 = vmatpush.msra.mxu0 %v633
    %1089 = vmatpush.msra.mxu0 %v629
    %1090 = vmatpush.msra.mxu0 %v625
    %1091 = vmatpush.msra.mxu0 %v621
    %1092 = vmatpush.msra.mxu0 %v617
    %1093 = vmatpush.msra.mxu0 %v613
    %1094 = vmatpush.msra.mxu0 %v609
    %1095 = vmatmul.f32.gmra.mxu0 %v156
    %v1096 = vpop.f32.mrf.mxu0
    %v1097 = vadd.f32 %v1077, %v1096
    %1098 = vdwg.mxu0
    %1099 = vmatpush.msra.mxu0 %v733
    %1100 = vmatpush.msra.mxu0 %v729
    %1101 = vmatpush.msra.mxu0 %v725
    %1102 = vmatpush.msra.mxu0 %v721
    %1103 = vmatpush.msra.mxu0 %v717
    %1104 = vmatpush.msra.mxu0 %v713
    %1105 = vmatpush.msra.mxu0 %v709
    %1106 = vmatpush.msra.mxu0 %v705
    %1107 = vmatpush.msra.mxu0 %v701
    %1108 = vmatpush.msra.mxu0 %v697
    %1109 = vmatpush.msra.mxu0 %v693
    %1110 = vmatpush.msra.mxu0 %v689
    %1111 = vmatpush.msra.mxu0 %v685
    %1112 = vmatpush.msra.mxu0 %v681
    %1113 = vmatpush.msra.mxu0 %v677
    %1114 = vmatpush.msra.mxu0 %v673
    %1115 = vmatmul.f32.gmra.mxu0 %v157
    %v1116 = vpop.f32.mrf.mxu0
    %v1117 = vadd.f32 %v1097, %v1116
    %1118 = vdwg.mxu0
    %1119 = vmatpush.msra.mxu0 %v797
    %1120 = vmatpush.msra.mxu0 %v793
    %1121 = vmatpush.msra.mxu0 %v789
    %1122 = vmatpush.msra.mxu0 %v785
    %1123 = vmatpush.msra.mxu0 %v781
    %1124 = vmatpush.msra.mxu0 %v777
    %1125 = vmatpush.msra.mxu0 %v773
    %1126 = vmatpush.msra.mxu0 %v769
    %1127 = vmatpush.msra.mxu0 %v765
    %1128 = vmatpush.msra.mxu0 %v761
    %1129 = vmatpush.msra.mxu0 %v757
    %1130 = vmatpush.msra.mxu0 %v753
    %1131 = vmatpush.msra.mxu0 %v749
    %1132 = vmatpush.msra.mxu0 %v745
    %1133 = vmatpush.msra.mxu0 %v741
    %1134 = vmatpush.msra.mxu0 %v737
    %1135 = vmatmul.f32.gmra.mxu0 %v158
    %v1136 = vpop.f32.mrf.mxu0
    %v1137 = vadd.f32 %v1117, %v1136
    %1138 = vdwg.mxu0
    %1139 = vmatpush.msra.mxu0 %v861
    %1140 = vmatpush.msra.mxu0 %v857
    %1141 = vmatpush.msra.mxu0 %v853
    %1142 = vmatpush.msra.mxu0 %v849
    %1143 = vmatpush.msra.mxu0 %v845
    %1144 = vmatpush.msra.mxu0 %v841
    %1145 = vmatpush.msra.mxu0 %v837
    %1146 = vmatpush.msra.mxu0 %v833
    %1147 = vmatpush.msra.mxu0 %v829
    %1148 = vmatpush.msra.mxu0 %v825
    %1149 = vmatpush.msra.mxu0 %v821
    %1150 = vmatpush.msra.mxu0 %v817
    %1151 = vmatpush.msra.mxu0 %v813
    %1152 = vmatpush.msra.mxu0 %v809
    %1153 = vmatpush.msra.mxu0 %v805
    %1154 = vmatpush.msra.mxu0 %v801
    %1155 = vmatmul.f32.gmra.mxu0 %v159
    %v1156 = vpop.f32.mrf.mxu0
    %v1157 = vadd.f32 %v1137, %v1156
    %1158 = vdwg.mxu0
    %1159 = vmatpush.msra.mxu0 %v925
    %1160 = vmatpush.msra.mxu0 %v921
    %1161 = vmatpush.msra.mxu0 %v917
    %1162 = vmatpush.msra.mxu0 %v913
    %1163 = vmatpush.msra.mxu0 %v909
    %1164 = vmatpush.msra.mxu0 %v905
    %1165 = vmatpush.msra.mxu0 %v901
    %1166 = vmatpush.msra.mxu0 %v897
    %1167 = vmatpush.msra.mxu0 %v893
    %1168 = vmatpush.msra.mxu0 %v889
    %1169 = vmatpush.msra.mxu0 %v885
    %1170 = vmatpush.msra.mxu0 %v881
    %1171 = vmatpush.msra.mxu0 %v877
    %1172 = vmatpush.msra.mxu0 %v873
    %1173 = vmatpush.msra.mxu0 %v869
    %1174 = vmatpush.msra.mxu0 %v865
    %1175 = vmatmul.f32.gmra.mxu0 %v160
    %v1176 = vpop.f32.mrf.mxu0
    %v1177 = vadd.f32 %v1157, %v1176
    %1178 = vdwg.mxu0
    %1179 = vmatpush.msra.mxu0 %v222
    %1180 = vmatpush.msra.mxu0 %v218
    %1181 = vmatpush.msra.mxu0 %v214
    %1182 = vmatpush.msra.mxu0 %v210
    %1183 = vmatpush.msra.mxu0 %v206
    %1184 = vmatpush.msra.mxu0 %v202
    %1185 = vmatpush.msra.mxu0 %v198
    %1186 = vmatpush.msra.mxu0 %v194
    %1187 = vmatpush.msra.mxu0 %v190
    %1188 = vmatpush.msra.mxu0 %v186
    %1189 = vmatpush.msra.mxu0 %v182
    %1190 = vmatpush.msra.mxu0 %v178
    %1191 = vmatpush.msra.mxu0 %v174
    %1192 = vmatpush.msra.mxu0 %v170
    %1193 = vmatpush.msra.mxu0 %v166
    %1194 = vmatpush.msra.mxu0 %v162
    %1195 = vmatmul.f32.gmra.mxu0 %v149
    %v1196 = vpop.f32.mrf.mxu0
    %v1197 = vadd.f32 %v932, %v1196
    %1198 = vdwg.mxu0
    %1199 = vmatpush.msra.mxu0 %v286
    %1200 = vmatpush.msra.mxu0 %v282
    %1201 = vmatpush.msra.mxu0 %v278
    %1202 = vmatpush.msra.mxu0 %v274
    %1203 = vmatpush.msra.mxu0 %v270
    %1204 = vmatpush.msra.mxu0 %v266
    %1205 = vmatpush.msra.mxu0 %v262
    %1206 = vmatpush.msra.mxu0 %v258
    %1207 = vmatpush.msra.mxu0 %v254
    %1208 = vmatpush.msra.mxu0 %v250
    %1209 = vmatpush.msra.mxu0 %v246
    %1210 = vmatpush.msra.mxu0 %v242
    %1211 = vmatpush.msra.mxu0 %v238
    %1212 = vmatpush.msra.mxu0 %v234
    %1213 = vmatpush.msra.mxu0 %v230
    %1214 = vmatpush.msra.mxu0 %v226
    %1215 = vmatmul.f32.gmra.mxu0 %v150
    %v1216 = vpop.f32.mrf.mxu0
    %v1217 = vadd.f32 %v1197, %v1216
    %1218 = vdwg.mxu0
    %1219 = vmatpush.msra.mxu0 %v350
    %1220 = vmatpush.msra.mxu0 %v346
    %1221 = vmatpush.msra.mxu0 %v342
    %1222 = vmatpush.msra.mxu0 %v338
    %1223 = vmatpush.msra.mxu0 %v334
    %1224 = vmatpush.msra.mxu0 %v330
    %1225 = vmatpush.msra.mxu0 %v326
    %1226 = vmatpush.msra.mxu0 %v322
    %1227 = vmatpush.msra.mxu0 %v318
    %1228 = vmatpush.msra.mxu0 %v314
    %1229 = vmatpush.msra.mxu0 %v310
    %1230 = vmatpush.msra.mxu0 %v306
    %1231 = vmatpush.msra.mxu0 %v302
    %1232 = vmatpush.msra.mxu0 %v298
    %1233 = vmatpush.msra.mxu0 %v294
    %1234 = vmatpush.msra.mxu0 %v290
    %1235 = vmatmul.f32.gmra.mxu0 %v151
    %v1236 = vpop.f32.mrf.mxu0
    %v1237 = vadd.f32 %v1217, %v1236
    %1238 = vdwg.mxu0
    %1239 = vmatpush.msra.mxu0 %v414
    %1240 = vmatpush.msra.mxu0 %v410
    %1241 = vmatpush.msra.mxu0 %v406
    %1242 = vmatpush.msra.mxu0 %v402
    %1243 = vmatpush.msra.mxu0 %v398
    %1244 = vmatpush.msra.mxu0 %v394
    %1245 = vmatpush.msra.mxu0 %v390
    %1246 = vmatpush.msra.mxu0 %v386
    %1247 = vmatpush.msra.mxu0 %v382
    %1248 = vmatpush.msra.mxu0 %v378
    %1249 = vmatpush.msra.mxu0 %v374
    %1250 = vmatpush.msra.mxu0 %v370
    %1251 = vmatpush.msra.mxu0 %v366
    %1252 = vmatpush.msra.mxu0 %v362
    %1253 = vmatpush.msra.mxu0 %v358
    %1254 = vmatpush.msra.mxu0 %v354
    %1255 = vmatmul.f32.gmra.mxu0 %v152
    %v1256 = vpop.f32.mrf.mxu0
    %v1257 = vadd.f32 %v1237, %v1256
    %1258 = vdwg.mxu0
    %1259 = vmatpush.msra.mxu0 %v478
    %1260 = vmatpush.msra.mxu0 %v474
    %1261 = vmatpush.msra.mxu0 %v470
    %1262 = vmatpush.msra.mxu0 %v466
    %1263 = vmatpush.msra.mxu0 %v462
    %1264 = vmatpush.msra.mxu0 %v458
    %1265 = vmatpush.msra.mxu0 %v454
    %1266 = vmatpush.msra.mxu0 %v450
    %1267 = vmatpush.msra.mxu0 %v446
    %1268 = vmatpush.msra.mxu0 %v442
    %1269 = vmatpush.msra.mxu0 %v438
    %1270 = vmatpush.msra.mxu0 %v434
    %1271 = vmatpush.msra.mxu0 %v430
    %1272 = vmatpush.msra.mxu0 %v426
    %1273 = vmatpush.msra.mxu0 %v422
    %1274 = vmatpush.msra.mxu0 %v418
    %1275 = vmatmul.f32.gmra.mxu0 %v153
    %v1276 = vpop.f32.mrf.mxu0
    %v1277 = vadd.f32 %v1257, %v1276
    %1278 = vdwg.mxu0
    %1279 = vmatpush.msra.mxu0 %v542
    %1280 = vmatpush.msra.mxu0 %v538
    %1281 = vmatpush.msra.mxu0 %v534
    %1282 = vmatpush.msra.mxu0 %v530
    %1283 = vmatpush.msra.mxu0 %v526
    %1284 = vmatpush.msra.mxu0 %v522
    %1285 = vmatpush.msra.mxu0 %v518
    %1286 = vmatpush.msra.mxu0 %v514
    %1287 = vmatpush.msra.mxu0 %v510
    %1288 = vmatpush.msra.mxu0 %v506
    %1289 = vmatpush.msra.mxu0 %v502
    %1290 = vmatpush.msra.mxu0 %v498
    %1291 = vmatpush.msra.mxu0 %v494
    %1292 = vmatpush.msra.mxu0 %v490
    %1293 = vmatpush.msra.mxu0 %v486
    %1294 = vmatpush.msra.mxu0 %v482
    %1295 = vmatmul.f32.gmra.mxu0 %v154
    %v1296 = vpop.f32.mrf.mxu0
    %v1297 = vadd.f32 %v1277, %v1296
    %1298 = vdwg.mxu0
    %1299 = vmatpush.msra.mxu0 %v606
    %1300 = vmatpush.msra.mxu0 %v602
    %1301 = vmatpush.msra.mxu0 %v598
    %1302 = vmatpush.msra.mxu0 %v594
    %1303 = vmatpush.msra.mxu0 %v590
    %1304 = vmatpush.msra.mxu0 %v586
    %1305 = vmatpush.msra.mxu0 %v582
    %1306 = vmatpush.msra.mxu0 %v578
    %1307 = vmatpush.msra.mxu0 %v574
    %1308 = vmatpush.msra.mxu0 %v570
    %1309 = vmatpush.msra.mxu0 %v566
    %1310 = vmatpush.msra.mxu0 %v562
    %1311 = vmatpush.msra.mxu0 %v558
    %1312 = vmatpush.msra.mxu0 %v554
    %1313 = vmatpush.msra.mxu0 %v550
    %1314 = vmatpush.msra.mxu0 %v546
    %1315 = vmatmul.f32.gmra.mxu0 %v155
    %v1316 = vpop.f32.mrf.mxu0
    %v1317 = vadd.f32 %v1297, %v1316
    %1318 = vdwg.mxu0
    %1319 = vmatpush.msra.mxu0 %v670
    %1320 = vmatpush.msra.mxu0 %v666
    %1321 = vmatpush.msra.mxu0 %v662
    %1322 = vmatpush.msra.mxu0 %v658
    %1323 = vmatpush.msra.mxu0 %v654
    %1324 = vmatpush.msra.mxu0 %v650
    %1325 = vmatpush.msra.mxu0 %v646
    %1326 = vmatpush.msra.mxu0 %v642
    %1327 = vmatpush.msra.mxu0 %v638
    %1328 = vmatpush.msra.mxu0 %v634
    %1329 = vmatpush.msra.mxu0 %v630
    %1330 = vmatpush.msra.mxu0 %v626
    %1331 = vmatpush.msra.mxu0 %v622
    %1332 = vmatpush.msra.mxu0 %v618
    %1333 = vmatpush.msra.mxu0 %v614
    %1334 = vmatpush.msra.mxu0 %v610
    %1335 = vmatmul.f32.gmra.mxu0 %v156
    %v1336 = vpop.f32.mrf.mxu0
    %v1337 = vadd.f32 %v1317, %v1336
    %1338 = vdwg.mxu0
    %1339 = vmatpush.msra.mxu0 %v734
    %1340 = vmatpush.msra.mxu0 %v730
    %1341 = vmatpush.msra.mxu0 %v726
    %1342 = vmatpush.msra.mxu0 %v722
    %1343 = vmatpush.msra.mxu0 %v718
    %1344 = vmatpush.msra.mxu0 %v714
    %1345 = vmatpush.msra.mxu0 %v710
    %1346 = vmatpush.msra.mxu0 %v706
    %1347 = vmatpush.msra.mxu0 %v702
    %1348 = vmatpush.msra.mxu0 %v698
    %1349 = vmatpush.msra.mxu0 %v694
    %1350 = vmatpush.msra.mxu0 %v690
    %1351 = vmatpush.msra.mxu0 %v686
    %1352 = vmatpush.msra.mxu0 %v682
    %1353 = vmatpush.msra.mxu0 %v678
    %1354 = vmatpush.msra.mxu0 %v674
    %1355 = vmatmul.f32.gmra.mxu0 %v157
    %v1356 = vpop.f32.mrf.mxu0
    %v1357 = vadd.f32 %v1337, %v1356
    %1358 = vdwg.mxu0
    %1359 = vmatpush.msra.mxu0 %v798
    %1360 = vmatpush.msra.mxu0 %v794
    %1361 = vmatpush.msra.mxu0 %v790
    %1362 = vmatpush.msra.mxu0 %v786
    %1363 = vmatpush.msra.mxu0 %v782
    %1364 = vmatpush.msra.mxu0 %v778
    %1365 = vmatpush.msra.mxu0 %v774
    %1366 = vmatpush.msra.mxu0 %v770
    %1367 = vmatpush.msra.mxu0 %v766
    %1368 = vmatpush.msra.mxu0 %v762
    %1369 = vmatpush.msra.mxu0 %v758
    %1370 = vmatpush.msra.mxu0 %v754
    %1371 = vmatpush.msra.mxu0 %v750
    %1372 = vmatpush.msra.mxu0 %v746
    %1373 = vmatpush.msra.mxu0 %v742
    %1374 = vmatpush.msra.mxu0 %v738
    %1375 = vmatmul.f32.gmra.mxu0 %v158
    %v1376 = vpop.f32.mrf.mxu0
    %v1377 = vadd.f32 %v1357, %v1376
    %1378 = vdwg.mxu0
    %1379 = vmatpush.msra.mxu0 %v862
    %1380 = vmatpush.msra.mxu0 %v858
    %1381 = vmatpush.msra.mxu0 %v854
    %1382 = vmatpush.msra.mxu0 %v850
    %1383 = vmatpush.msra.mxu0 %v846
    %1384 = vmatpush.msra.mxu0 %v842
    %1385 = vmatpush.msra.mxu0 %v838
    %1386 = vmatpush.msra.mxu0 %v834
    %1387 = vmatpush.msra.mxu0 %v830
    %1388 = vmatpush.msra.mxu0 %v826
    %1389 = vmatpush.msra.mxu0 %v822
    %1390 = vmatpush.msra.mxu0 %v818
    %1391 = vmatpush.msra.mxu0 %v814
    %1392 = vmatpush.msra.mxu0 %v810
    %1393 = vmatpush.msra.mxu0 %v806
    %1394 = vmatpush.msra.mxu0 %v802
    %1395 = vmatmul.f32.gmra.mxu0 %v159
    %v1396 = vpop.f32.mrf.mxu0
    %v1397 = vadd.f32 %v1377, %v1396
    %1398 = vdwg.mxu0
    %1399 = vmatpush.msra.mxu0 %v926
    %1400 = vmatpush.msra.mxu0 %v922
    %1401 = vmatpush.msra.mxu0 %v918
    %1402 = vmatpush.msra.mxu0 %v914
    %1403 = vmatpush.msra.mxu0 %v910
    %1404 = vmatpush.msra.mxu0 %v906
    %1405 = vmatpush.msra.mxu0 %v902
    %1406 = vmatpush.msra.mxu0 %v898
    %1407 = vmatpush.msra.mxu0 %v894
    %1408 = vmatpush.msra.mxu0 %v890
    %1409 = vmatpush.msra.mxu0 %v886
    %1410 = vmatpush.msra.mxu0 %v882
    %1411 = vmatpush.msra.mxu0 %v878
    %1412 = vmatpush.msra.mxu0 %v874
    %1413 = vmatpush.msra.mxu0 %v870
    %1414 = vmatpush.msra.mxu0 %v866
    %1415 = vmatmul.f32.gmra.mxu0 %v160
    %v1416 = vpop.f32.mrf.mxu0
    %v1417 = vadd.f32 %v1397, %v1416
    %1418 = vdwg.mxu0
    %1419 = vmatpush.msra.mxu0 %v223
    %1420 = vmatpush.msra.mxu0 %v219
    %1421 = vmatpush.msra.mxu0 %v215
    %1422 = vmatpush.msra.mxu0 %v211
    %1423 = vmatpush.msra.mxu0 %v207
    %1424 = vmatpush.msra.mxu0 %v203
    %1425 = vmatpush.msra.mxu0 %v199
    %1426 = vmatpush.msra.mxu0 %v195
    %1427 = vmatpush.msra.mxu0 %v191
    %1428 = vmatpush.msra.mxu0 %v187
    %1429 = vmatpush.msra.mxu0 %v183
    %1430 = vmatpush.msra.mxu0 %v179
    %1431 = vmatpush.msra.mxu0 %v175
    %1432 = vmatpush.msra.mxu0 %v171
    %1433 = vmatpush.msra.mxu0 %v167
    %1434 = vmatpush.msra.mxu0 %v163
    %1435 = vmatmul.f32.gmra.mxu0 %v149
    %v1436 = vpop.f32.mrf.mxu0
    %v1437 = vadd.f32 %v933, %v1436
    %1438 = vdwg.mxu0
    %1439 = vmatpush.msra.mxu0 %v287
    %1440 = vmatpush.msra.mxu0 %v283
    %1441 = vmatpush.msra.mxu0 %v279
    %1442 = vmatpush.msra.mxu0 %v275
    %1443 = vmatpush.msra.mxu0 %v271
    %1444 = vmatpush.msra.mxu0 %v267
    %1445 = vmatpush.msra.mxu0 %v263
    %1446 = vmatpush.msra.mxu0 %v259
    %1447 = vmatpush.msra.mxu0 %v255
    %1448 = vmatpush.msra.mxu0 %v251
    %1449 = vmatpush.msra.mxu0 %v247
    %1450 = vmatpush.msra.mxu0 %v243
    %1451 = vmatpush.msra.mxu0 %v239
    %1452 = vmatpush.msra.mxu0 %v235
    %1453 = vmatpush.msra.mxu0 %v231
    %1454 = vmatpush.msra.mxu0 %v227
    %1455 = vmatmul.f32.gmra.mxu0 %v150
    %v1456 = vpop.f32.mrf.mxu0
    %v1457 = vadd.f32 %v1437, %v1456
    %1458 = vdwg.mxu0
    %1459 = vmatpush.msra.mxu0 %v351
    %1460 = vmatpush.msra.mxu0 %v347
    %1461 = vmatpush.msra.mxu0 %v343
    %1462 = vmatpush.msra.mxu0 %v339
    %1463 = vmatpush.msra.mxu0 %v335
    %1464 = vmatpush.msra.mxu0 %v331
    %1465 = vmatpush.msra.mxu0 %v327
    %1466 = vmatpush.msra.mxu0 %v323
    %1467 = vmatpush.msra.mxu0 %v319
    %1468 = vmatpush.msra.mxu0 %v315
    %1469 = vmatpush.msra.mxu0 %v311
    %1470 = vmatpush.msra.mxu0 %v307
    %1471 = vmatpush.msra.mxu0 %v303
    %1472 = vmatpush.msra.mxu0 %v299
    %1473 = vmatpush.msra.mxu0 %v295
    %1474 = vmatpush.msra.mxu0 %v291
    %1475 = vmatmul.f32.gmra.mxu0 %v151
    %v1476 = vpop.f32.mrf.mxu0
    %v1477 = vadd.f32 %v1457, %v1476
    %1478 = vdwg.mxu0
    %1479 = vmatpush.msra.mxu0 %v415
    %1480 = vmatpush.msra.mxu0 %v411
    %1481 = vmatpush.msra.mxu0 %v407
    %1482 = vmatpush.msra.mxu0 %v403
    %1483 = vmatpush.msra.mxu0 %v399
    %1484 = vmatpush.msra.mxu0 %v395
    %1485 = vmatpush.msra.mxu0 %v391
    %1486 = vmatpush.msra.mxu0 %v387
    %1487 = vmatpush.msra.mxu0 %v383
    %1488 = vmatpush.msra.mxu0 %v379
    %1489 = vmatpush.msra.mxu0 %v375
    %1490 = vmatpush.msra.mxu0 %v371
    %1491 = vmatpush.msra.mxu0 %v367
    %1492 = vmatpush.msra.mxu0 %v363
    %1493 = vmatpush.msra.mxu0 %v359
    %1494 = vmatpush.msra.mxu0 %v355
    %1495 = vmatmul.f32.gmra.mxu0 %v152
    %v1496 = vpop.f32.mrf.mxu0
    %v1497 = vadd.f32 %v1477, %v1496
    %1498 = vdwg.mxu0
    %1499 = vmatpush.msra.mxu0 %v479
    %1500 = vmatpush.msra.mxu0 %v475
    %1501 = vmatpush.msra.mxu0 %v471
    %1502 = vmatpush.msra.mxu0 %v467
    %1503 = vmatpush.msra.mxu0 %v463
    %1504 = vmatpush.msra.mxu0 %v459
    %1505 = vmatpush.msra.mxu0 %v455
    %1506 = vmatpush.msra.mxu0 %v451
    %1507 = vmatpush.msra.mxu0 %v447
    %1508 = vmatpush.msra.mxu0 %v443
    %1509 = vmatpush.msra.mxu0 %v439
    %1510 = vmatpush.msra.mxu0 %v435
    %1511 = vmatpush.msra.mxu0 %v431
    %1512 = vmatpush.msra.mxu0 %v427
    %1513 = vmatpush.msra.mxu0 %v423
    %1514 = vmatpush.msra.mxu0 %v419
    %1515 = vmatmul.f32.gmra.mxu0 %v153
    %v1516 = vpop.f32.mrf.mxu0
    %v1517 = vadd.f32 %v1497, %v1516
    %1518 = vdwg.mxu0
    %1519 = vmatpush.msra.mxu0 %v543
    %1520 = vmatpush.msra.mxu0 %v539
    %1521 = vmatpush.msra.mxu0 %v535
    %1522 = vmatpush.msra.mxu0 %v531
    %1523 = vmatpush.msra.mxu0 %v527
    %1524 = vmatpush.msra.mxu0 %v523
    %1525 = vmatpush.msra.mxu0 %v519
    %1526 = vmatpush.msra.mxu0 %v515
    %1527 = vmatpush.msra.mxu0 %v511
    %1528 = vmatpush.msra.mxu0 %v507
    %1529 = vmatpush.msra.mxu0 %v503
    %1530 = vmatpush.msra.mxu0 %v499
    %1531 = vmatpush.msra.mxu0 %v495
    %1532 = vmatpush.msra.mxu0 %v491
    %1533 = vmatpush.msra.mxu0 %v487
    %1534 = vmatpush.msra.mxu0 %v483
    %1535 = vmatmul.f32.gmra.mxu0 %v154
    %v1536 = vpop.f32.mrf.mxu0
    %v1537 = vadd.f32 %v1517, %v1536
    %1538 = vdwg.mxu0
    %1539 = vmatpush.msra.mxu0 %v607
    %1540 = vmatpush.msra.mxu0 %v603
    %1541 = vmatpush.msra.mxu0 %v599
    %1542 = vmatpush.msra.mxu0 %v595
    %1543 = vmatpush.msra.mxu0 %v591
    %1544 = vmatpush.msra.mxu0 %v587
    %1545 = vmatpush.msra.mxu0 %v583
    %1546 = vmatpush.msra.mxu0 %v579
    %1547 = vmatpush.msra.mxu0 %v575
    %1548 = vmatpush.msra.mxu0 %v571
    %1549 = vmatpush.msra.mxu0 %v567
    %1550 = vmatpush.msra.mxu0 %v563
    %1551 = vmatpush.msra.mxu0 %v559
    %1552 = vmatpush.msra.mxu0 %v555
    %1553 = vmatpush.msra.mxu0 %v551
    %1554 = vmatpush.msra.mxu0 %v547
    %1555 = vmatmul.f32.gmra.mxu0 %v155
    %v1556 = vpop.f32.mrf.mxu0
    %v1557 = vadd.f32 %v1537, %v1556
    %1558 = vdwg.mxu0
    %1559 = vmatpush.msra.mxu0 %v671
    %1560 = vmatpush.msra.mxu0 %v667
    %1561 = vmatpush.msra.mxu0 %v663
    %1562 = vmatpush.msra.mxu0 %v659
    %1563 = vmatpush.msra.mxu0 %v655
    %1564 = vmatpush.msra.mxu0 %v651
    %1565 = vmatpush.msra.mxu0 %v647
    %1566 = vmatpush.msra.mxu0 %v643
    %1567 = vmatpush.msra.mxu0 %v639
    %1568 = vmatpush.msra.mxu0 %v635
    %1569 = vmatpush.msra.mxu0 %v631
    %1570 = vmatpush.msra.mxu0 %v627
    %1571 = vmatpush.msra.mxu0 %v623
    %1572 = vmatpush.msra.mxu0 %v619
    %1573 = vmatpush.msra.mxu0 %v615
    %1574 = vmatpush.msra.mxu0 %v611
    %1575 = vmatmul.f32.gmra.mxu0 %v156
    %v1576 = vpop.f32.mrf.mxu0
    %v1577 = vadd.f32 %v1557, %v1576
    %1578 = vdwg.mxu0
    %1579 = vmatpush.msra.mxu0 %v735
    %1580 = vmatpush.msra.mxu0 %v731
    %1581 = vmatpush.msra.mxu0 %v727
    %1582 = vmatpush.msra.mxu0 %v723
    %1583 = vmatpush.msra.mxu0 %v719
    %1584 = vmatpush.msra.mxu0 %v715
    %1585 = vmatpush.msra.mxu0 %v711
    %1586 = vmatpush.msra.mxu0 %v707
    %1587 = vmatpush.msra.mxu0 %v703
    %1588 = vmatpush.msra.mxu0 %v699
    %1589 = vmatpush.msra.mxu0 %v695
    %1590 = vmatpush.msra.mxu0 %v691
    %1591 = vmatpush.msra.mxu0 %v687
    %1592 = vmatpush.msra.mxu0 %v683
    %1593 = vmatpush.msra.mxu0 %v679
    %1594 = vmatpush.msra.mxu0 %v675
    %1595 = vmatmul.f32.gmra.mxu0 %v157
    %v1596 = vpop.f32.mrf.mxu0
    %v1597 = vadd.f32 %v1577, %v1596
    %1598 = vdwg.mxu0
    %1599 = vmatpush.msra.mxu0 %v799
    %1600 = vmatpush.msra.mxu0 %v795
    %1601 = vmatpush.msra.mxu0 %v791
    %1602 = vmatpush.msra.mxu0 %v787
    %1603 = vmatpush.msra.mxu0 %v783
    %1604 = vmatpush.msra.mxu0 %v779
    %1605 = vmatpush.msra.mxu0 %v775
    %1606 = vmatpush.msra.mxu0 %v771
    %1607 = vmatpush.msra.mxu0 %v767
    %1608 = vmatpush.msra.mxu0 %v763
    %1609 = vmatpush.msra.mxu0 %v759
    %1610 = vmatpush.msra.mxu0 %v755
    %1611 = vmatpush.msra.mxu0 %v751
    %1612 = vmatpush.msra.mxu0 %v747
    %1613 = vmatpush.msra.mxu0 %v743
    %1614 = vmatpush.msra.mxu0 %v739
    %1615 = vmatmul.f32.gmra.mxu0 %v158
    %v1616 = vpop.f32.mrf.mxu0
    %v1617 = vadd.f32 %v1597, %v1616
    %1618 = vdwg.mxu0
    %1619 = vmatpush.msra.mxu0 %v863
    %1620 = vmatpush.msra.mxu0 %v859
    %1621 = vmatpush.msra.mxu0 %v855
    %1622 = vmatpush.msra.mxu0 %v851
    %1623 = vmatpush.msra.mxu0 %v847
    %1624 = vmatpush.msra.mxu0 %v843
    %1625 = vmatpush.msra.mxu0 %v839
    %1626 = vmatpush.msra.mxu0 %v835
    %1627 = vmatpush.msra.mxu0 %v831
    %1628 = vmatpush.msra.mxu0 %v827
    %1629 = vmatpush.msra.mxu0 %v823
    %1630 = vmatpush.msra.mxu0 %v819
    %1631 = vmatpush.msra.mxu0 %v815
    %1632 = vmatpush.msra.mxu0 %v811
    %1633 = vmatpush.msra.mxu0 %v807
    %1634 = vmatpush.msra.mxu0 %v803
    %1635 = vmatmul.f32.gmra.mxu0 %v159
    %v1636 = vpop.f32.mrf.mxu0
    %v1637 = vadd.f32 %v1617, %v1636
    %1638 = vdwg.mxu0
    %1639 = vmatpush.msra.mxu0 %v927
    %1640 = vmatpush.msra.mxu0 %v923
    %1641 = vmatpush.msra.mxu0 %v919
    %1642 = vmatpush.msra.mxu0 %v915
    %1643 = vmatpush.msra.mxu0 %v911
    %1644 = vmatpush.msra.mxu0 %v907
    %1645 = vmatpush.msra.mxu0 %v903
    %1646 = vmatpush.msra.mxu0 %v899
    %1647 = vmatpush.msra.mxu0 %v895
    %1648 = vmatpush.msra.mxu0 %v891
    %1649 = vmatpush.msra.mxu0 %v887
    %1650 = vmatpush.msra.mxu0 %v883
    %1651 = vmatpush.msra.mxu0 %v879
    %1652 = vmatpush.msra.mxu0 %v875
    %1653 = vmatpush.msra.mxu0 %v871
    %1654 = vmatpush.msra.mxu0 %v867
    %1655 = vmatmul.f32.gmra.mxu0 %v160
    %v1656 = vpop.f32.mrf.mxu0
    %v1657 = vadd.f32 %v1637, %v1656
    %1658 = vdwg.mxu0
    %1659 = vmatpush.msra.mxu0 %v224
    %1660 = vmatpush.msra.mxu0 %v220
    %1661 = vmatpush.msra.mxu0 %v216
    %1662 = vmatpush.msra.mxu0 %v212
    %1663 = vmatpush.msra.mxu0 %v208
    %1664 = vmatpush.msra.mxu0 %v204
    %1665 = vmatpush.msra.mxu0 %v200
    %1666 = vmatpush.msra.mxu0 %v196
    %1667 = vmatpush.msra.mxu0 %v192
    %1668 = vmatpush.msra.mxu0 %v188
    %1669 = vmatpush.msra.mxu0 %v184
    %1670 = vmatpush.msra.mxu0 %v180
    %1671 = vmatpush.msra.mxu0 %v176
    %1672 = vmatpush.msra.mxu0 %v172
    %1673 = vmatpush.msra.mxu0 %v168
    %1674 = vmatpush.msra.mxu0 %v164
    %1675 = vmatmul.f32.gmra.mxu0 %v149
    %v1676 = vpop.f32.mrf.mxu0
    %v1677 = vadd.f32 %v934, %v1676
    %1678 = vdwg.mxu0
    %1679 = vmatpush.msra.mxu0 %v288
    %1680 = vmatpush.msra.mxu0 %v284
    %1681 = vmatpush.msra.mxu0 %v280
    %1682 = vmatpush.msra.mxu0 %v276
    %1683 = vmatpush.msra.mxu0 %v272
    %1684 = vmatpush.msra.mxu0 %v268
    %1685 = vmatpush.msra.mxu0 %v264
    %1686 = vmatpush.msra.mxu0 %v260
    %1687 = vmatpush.msra.mxu0 %v256
    %1688 = vmatpush.msra.mxu0 %v252
    %1689 = vmatpush.msra.mxu0 %v248
    %1690 = vmatpush.msra.mxu0 %v244
    %1691 = vmatpush.msra.mxu0 %v240
    %1692 = vmatpush.msra.mxu0 %v236
    %1693 = vmatpush.msra.mxu0 %v232
    %1694 = vmatpush.msra.mxu0 %v228
    %1695 = vmatmul.f32.gmra.mxu0 %v150
    %v1696 = vpop.f32.mrf.mxu0
    %v1697 = vadd.f32 %v1677, %v1696
    %1698 = vdwg.mxu0
    %1699 = vmatpush.msra.mxu0 %v352
    %1700 = vmatpush.msra.mxu0 %v348
    %1701 = vmatpush.msra.mxu0 %v344
    %1702 = vmatpush.msra.mxu0 %v340
    %1703 = vmatpush.msra.mxu0 %v336
    %1704 = vmatpush.msra.mxu0 %v332
    %1705 = vmatpush.msra.mxu0 %v328
    %1706 = vmatpush.msra.mxu0 %v324
    %1707 = vmatpush.msra.mxu0 %v320
    %1708 = vmatpush.msra.mxu0 %v316
    %1709 = vmatpush.msra.mxu0 %v312
    %1710 = vmatpush.msra.mxu0 %v308
    %1711 = vmatpush.msra.mxu0 %v304
    %1712 = vmatpush.msra.mxu0 %v300
    %1713 = vmatpush.msra.mxu0 %v296
    %1714 = vmatpush.msra.mxu0 %v292
    %1715 = vmatmul.f32.gmra.mxu0 %v151
    %v1716 = vpop.f32.mrf.mxu0
    %v1717 = vadd.f32 %v1697, %v1716
    %1718 = vdwg.mxu0
    %1719 = vmatpush.msra.mxu0 %v416
    %1720 = vmatpush.msra.mxu0 %v412
    %1721 = vmatpush.msra.mxu0 %v408
    %1722 = vmatpush.msra.mxu0 %v404
    %1723 = vmatpush.msra.mxu0 %v400
    %1724 = vmatpush.msra.mxu0 %v396
    %1725 = vmatpush.msra.mxu0 %v392
    %1726 = vmatpush.msra.mxu0 %v388
    %1727 = vmatpush.msra.mxu0 %v384
    %1728 = vmatpush.msra.mxu0 %v380
    %1729 = vmatpush.msra.mxu0 %v376
    %1730 = vmatpush.msra.mxu0 %v372
    %1731 = vmatpush.msra.mxu0 %v368
    %1732 = vmatpush.msra.mxu0 %v364
    %1733 = vmatpush.msra.mxu0 %v360
    %1734 = vmatpush.msra.mxu0 %v356
    %1735 = vmatmul.f32.gmra.mxu0 %v152
    %v1736 = vpop.f32.mrf.mxu0
    %v1737 = vadd.f32 %v1717, %v1736
    %1738 = vdwg.mxu0
    %1739 = vmatpush.msra.mxu0 %v480
    %1740 = vmatpush.msra.mxu0 %v476
    %1741 = vmatpush.msra.mxu0 %v472
    %1742 = vmatpush.msra.mxu0 %v468
    %1743 = vmatpush.msra.mxu0 %v464
    %1744 = vmatpush.msra.mxu0 %v460
    %1745 = vmatpush.msra.mxu0 %v456
    %1746 = vmatpush.msra.mxu0 %v452
    %1747 = vmatpush.msra.mxu0 %v448
    %1748 = vmatpush.msra.mxu0 %v444
    %1749 = vmatpush.msra.mxu0 %v440
    %1750 = vmatpush.msra.mxu0 %v436
    %1751 = vmatpush.msra.mxu0 %v432
    %1752 = vmatpush.msra.mxu0 %v428
    %1753 = vmatpush.msra.mxu0 %v424
    %1754 = vmatpush.msra.mxu0 %v420
    %1755 = vmatmul.f32.gmra.mxu0 %v153
    %v1756 = vpop.f32.mrf.mxu0
    %v1757 = vadd.f32 %v1737, %v1756
    %1758 = vdwg.mxu0
    %1759 = vmatpush.msra.mxu0 %v544
    %1760 = vmatpush.msra.mxu0 %v540
    %1761 = vmatpush.msra.mxu0 %v536
    %1762 = vmatpush.msra.mxu0 %v532
    %1763 = vmatpush.msra.mxu0 %v528
    %1764 = vmatpush.msra.mxu0 %v524
    %1765 = vmatpush.msra.mxu0 %v520
    %1766 = vmatpush.msra.mxu0 %v516
    %1767 = vmatpush.msra.mxu0 %v512
    %1768 = vmatpush.msra.mxu0 %v508
    %1769 = vmatpush.msra.mxu0 %v504
    %1770 = vmatpush.msra.mxu0 %v500
    %1771 = vmatpush.msra.mxu0 %v496
    %1772 = vmatpush.msra.mxu0 %v492
    %1773 = vmatpush.msra.mxu0 %v488
    %1774 = vmatpush.msra.mxu0 %v484
    %1775 = vmatmul.f32.gmra.mxu0 %v154
    %v1776 = vpop.f32.mrf.mxu0
    %v1777 = vadd.f32 %v1757, %v1776
    %1778 = vdwg.mxu0
    %1779 = vmatpush.msra.mxu0 %v608
    %1780 = vmatpush.msra.mxu0 %v604
    %1781 = vmatpush.msra.mxu0 %v600
    %1782 = vmatpush.msra.mxu0 %v596
    %1783 = vmatpush.msra.mxu0 %v592
    %1784 = vmatpush.msra.mxu0 %v588
    %1785 = vmatpush.msra.mxu0 %v584
    %1786 = vmatpush.msra.mxu0 %v580
    %1787 = vmatpush.msra.mxu0 %v576
    %1788 = vmatpush.msra.mxu0 %v572
    %1789 = vmatpush.msra.mxu0 %v568
    %1790 = vmatpush.msra.mxu0 %v564
    %1791 = vmatpush.msra.mxu0 %v560
    %1792 = vmatpush.msra.mxu0 %v556
    %1793 = vmatpush.msra.mxu0 %v552
    %1794 = vmatpush.msra.mxu0 %v548
    %1795 = vmatmul.f32.gmra.mxu0 %v155
    %v1796 = vpop.f32.mrf.mxu0
    %v1797 = vadd.f32 %v1777, %v1796
    %1798 = vdwg.mxu0
    %1799 = vmatpush.msra.mxu0 %v672
    %1800 = vmatpush.msra.mxu0 %v668
    %1801 = vmatpush.msra.mxu0 %v664
    %1802 = vmatpush.msra.mxu0 %v660
    %1803 = vmatpush.msra.mxu0 %v656
    %1804 = vmatpush.msra.mxu0 %v652
    %1805 = vmatpush.msra.mxu0 %v648
    %1806 = vmatpush.msra.mxu0 %v644
    %1807 = vmatpush.msra.mxu0 %v640
    %1808 = vmatpush.msra.mxu0 %v636
    %1809 = vmatpush.msra.mxu0 %v632
    %1810 = vmatpush.msra.mxu0 %v628
    %1811 = vmatpush.msra.mxu0 %v624
    %1812 = vmatpush.msra.mxu0 %v620
    %1813 = vmatpush.msra.mxu0 %v616
    %1814 = vmatpush.msra.mxu0 %v612
    %1815 = vmatmul.f32.gmra.mxu0 %v156
    %v1816 = vpop.f32.mrf.mxu0
    %v1817 = vadd.f32 %v1797, %v1816
    %1818 = vdwg.mxu0
    %1819 = vmatpush.msra.mxu0 %v736
    %1820 = vmatpush.msra.mxu0 %v732
    %1821 = vmatpush.msra.mxu0 %v728
    %1822 = vmatpush.msra.mxu0 %v724
    %1823 = vmatpush.msra.mxu0 %v720
    %1824 = vmatpush.msra.mxu0 %v716
    %1825 = vmatpush.msra.mxu0 %v712
    %1826 = vmatpush.msra.mxu0 %v708
    %1827 = vmatpush.msra.mxu0 %v704
    %1828 = vmatpush.msra.mxu0 %v700
    %1829 = vmatpush.msra.mxu0 %v696
    %1830 = vmatpush.msra.mxu0 %v692
    %1831 = vmatpush.msra.mxu0 %v688
    %1832 = vmatpush.msra.mxu0 %v684
    %1833 = vmatpush.msra.mxu0 %v680
    %1834 = vmatpush.msra.mxu0 %v676
    %1835 = vmatmul.f32.gmra.mxu0 %v157
    %v1836 = vpop.f32.mrf.mxu0
    %v1837 = vadd.f32 %v1817, %v1836
    %1838 = vdwg.mxu0
    %1839 = vmatpush.msra.mxu0 %v800
    %1840 = vmatpush.msra.mxu0 %v796
    %1841 = vmatpush.msra.mxu0 %v792
    %1842 = vmatpush.msra.mxu0 %v788
    %1843 = vmatpush.msra.mxu0 %v784
    %1844 = vmatpush.msra.mxu0 %v780
    %1845 = vmatpush.msra.mxu0 %v776
    %1846 = vmatpush.msra.mxu0 %v772
    %1847 = vmatpush.msra.mxu0 %v768
    %1848 = vmatpush.msra.mxu0 %v764
    %1849 = vmatpush.msra.mxu0 %v760
    %1850 = vmatpush.msra.mxu0 %v756
    %1851 = vmatpush.msra.mxu0 %v752
    %1852 = vmatpush.msra.mxu0 %v748
    %1853 = vmatpush.msra.mxu0 %v744
    %1854 = vmatpush.msra.mxu0 %v740
    %1855 = vmatmul.f32.gmra.mxu0 %v158
    %v1856 = vpop.f32.mrf.mxu0
    %v1857 = vadd.f32 %v1837, %v1856
    %1858 = vdwg.mxu0
    %1859 = vmatpush.msra.mxu0 %v864
    %1860 = vmatpush.msra.mxu0 %v860
    %1861 = vmatpush.msra.mxu0 %v856
    %1862 = vmatpush.msra.mxu0 %v852
    %1863 = vmatpush.msra.mxu0 %v848
    %1864 = vmatpush.msra.mxu0 %v844
    %1865 = vmatpush.msra.mxu0 %v840
    %1866 = vmatpush.msra.mxu0 %v836
    %1867 = vmatpush.msra.mxu0 %v832
    %1868 = vmatpush.msra.mxu0 %v828
    %1869 = vmatpush.msra.mxu0 %v824
    %1870 = vmatpush.msra.mxu0 %v820
    %1871 = vmatpush.msra.mxu0 %v816
    %1872 = vmatpush.msra.mxu0 %v812
    %1873 = vmatpush.msra.mxu0 %v808
    %1874 = vmatpush.msra.mxu0 %v804
    %1875 = vmatmul.f32.gmra.mxu0 %v159
    %v1876 = vpop.f32.mrf.mxu0
    %v1877 = vadd.f32 %v1857, %v1876
    %1878 = vdwg.mxu0
    %1879 = vmatpush.msra.mxu0 %v928
    %1880 = vmatpush.msra.mxu0 %v924
    %1881 = vmatpush.msra.mxu0 %v920
    %1882 = vmatpush.msra.mxu0 %v916
    %1883 = vmatpush.msra.mxu0 %v912
    %1884 = vmatpush.msra.mxu0 %v908
    %1885 = vmatpush.msra.mxu0 %v904
    %1886 = vmatpush.msra.mxu0 %v900
    %1887 = vmatpush.msra.mxu0 %v896
    %1888 = vmatpush.msra.mxu0 %v892
    %1889 = vmatpush.msra.mxu0 %v888
    %1890 = vmatpush.msra.mxu0 %v884
    %1891 = vmatpush.msra.mxu0 %v880
    %1892 = vmatpush.msra.mxu0 %v876
    %1893 = vmatpush.msra.mxu0 %v872
    %1894 = vmatpush.msra.mxu0 %v868
    %1895 = vmatmul.f32.gmra.mxu0 %v160
    %v1896 = vpop.f32.mrf.mxu0
    %v1897 = vadd.f32 %v1877, %v1896
    %1898 = vdwg.mxu0
    %v1899 = vmax.f32 %v1177, 0.0
    %v1900 = vmax.f32 %v1417, 0.0
    %v1901 = vmax.f32 %v1657, 0.0
    %v1902 = vmax.f32 %v1897, 0.0
    %v1903 = vld [vmem:[#allocation8] sm:$0xff]
    %v1904 = vld [vmem:[#allocation8 + $0x8] sm:$0xff]
    %v1905 = vld [vmem:[#allocation8 + $0x10] sm:$0xff]
    %v1906 = vld [vmem:[#allocation8 + $0x18] sm:$0xff]
    %v1907 = vld [vmem:[#allocation8 + $0x20] sm:$0xff]
    %v1908 = vld [vmem:[#allocation8 + $0x28] sm:$0xff]
    %v1909 = vld [vmem:[#allocation8 + $0x30] sm:$0xff]
    %v1910 = vld [vmem:[#allocation8 + $0x38] sm:$0xff]
    %v1911 = vld [vmem:[#allocation8 + $0x40] sm:$0xff]
    %v1912 = vld [vmem:[#allocation8 + $0x48] sm:$0xff]
    %v1913 = vld [vmem:[#allocation8 + $0x50] sm:$0xff]
    %v1914 = vld [vmem:[#allocation8 + $0x58] sm:$0xff]
    %v1915 = vld [vmem:[#allocation8 + $0x60] sm:$0xff]
    %v1916 = vld [vmem:[#allocation8 + $0x68] sm:$0xff]
    %v1917 = vld [vmem:[#allocation8 + $0x70] sm:$0xff]
    %v1918 = vld [vmem:[#allocation8 + $0x78] sm:$0xff]
    %v1919 = vld [vmem:[#allocation8 + $0x80] sm:$0xff]
    %v1920 = vld [vmem:[#allocation8 + $0x88] sm:$0xff]
    %v1921 = vld [vmem:[#allocation8 + $0x90] sm:$0xff]
    %v1922 = vld [vmem:[#allocation8 + $0x98] sm:$0xff]
    %v1923 = vld [vmem:[#allocation8 + $0xa0] sm:$0xff]
    %v1924 = vld [vmem:[#allocation8 + $0xa8] sm:$0xff]
    %v1925 = vld [vmem:[#allocation8 + $0xb0] sm:$0xff]
    %v1926 = vld [vmem:[#allocation8 + $0xb8] sm:$0xff]
    %v1927 = vld [vmem:[#allocation8 + $0xc0] sm:$0xff]
    %v1928 = vld [vmem:[#allocation8 + $0xc8] sm:$0xff]
    %v1929 = vld [vmem:[#allocation8 + $0xd0] sm:$0xff]
    %v1930 = vld [vmem:[#allocation8 + $0xd8] sm:$0xff]
    %v1931 = vld [vmem:[#allocation8 + $0xe0] sm:$0xff]
    %v1932 = vld [vmem:[#allocation8 + $0xe8] sm:$0xff]
    %v1933 = vld [vmem:[#allocation8 + $0xf0] sm:$0xff]
    %v1934 = vld [vmem:[#allocation8 + $0xf8] sm:$0xff]
    %v1935 = vld [vmem:[#allocation8 + $0x100] sm:$0xff]
    %v1936 = vld [vmem:[#allocation8 + $0x108] sm:$0xff]
    %v1937 = vld [vmem:[#allocation8 + $0x110] sm:$0xff]
    %v1938 = vld [vmem:[#allocation8 + $0x118] sm:$0xff]
    %v1939 = vld [vmem:[#allocation8 + $0x120] sm:$0xff]
    %v1940 = vld [vmem:[#allocation8 + $0x128] sm:$0xff]
    %v1941 = vld [vmem:[#allocation8 + $0x130] sm:$0xff]
    %v1942 = vld [vmem:[#allocation8 + $0x138] sm:$0xff]
    %v1943 = vld [vmem:[#allocation8 + $0x140] sm:$0xff]
    %v1944 = vld [vmem:[#allocation8 + $0x148] sm:$0xff]
    %v1945 = vld [vmem:[#allocation8 + $0x150] sm:$0xff]
    %v1946 = vld [vmem:[#allocation8 + $0x158] sm:$0xff]
    %v1947 = vld [vmem:[#allocation8 + $0x160] sm:$0xff]
    %v1948 = vld [vmem:[#allocation8 + $0x168] sm:$0xff]
    %v1949 = vld [vmem:[#allocation8 + $0x170] sm:$0xff]
    %v1950 = vld [vmem:[#allocation8 + $0x178] sm:$0xff]
    %v1951 = vld [vmem:[#allocation8 + $0x180] sm:$0xff]
    %v1952 = vld [vmem:[#allocation8 + $0x188] sm:$0xff]
    %v1953 = vld [vmem:[#allocation8 + $0x190] sm:$0xff]
    %v1954 = vld [vmem:[#allocation8 + $0x198] sm:$0xff]
    %v1955 = vld [vmem:[#allocation8 + $0x1a0] sm:$0xff]
    %v1956 = vld [vmem:[#allocation8 + $0x1a8] sm:$0xff]
    %v1957 = vld [vmem:[#allocation8 + $0x1b0] sm:$0xff]
    %v1958 = vld [vmem:[#allocation8 + $0x1b8] sm:$0xff]
    %v1959 = vld [vmem:[#allocation8 + $0x1c0] sm:$0xff]
    %v1960 = vld [vmem:[#allocation8 + $0x1c8] sm:$0xff]
    %v1961 = vld [vmem:[#allocation8 + $0x1d0] sm:$0xff]
    %v1962 = vld [vmem:[#allocation8 + $0x1d8] sm:$0xff]
    %v1963 = vld [vmem:[#allocation8 + $0x1e0] sm:$0xff]
    %v1964 = vld [vmem:[#allocation8 + $0x1e8] sm:$0xff]
    %v1965 = vld [vmem:[#allocation8 + $0x1f0] sm:$0xff]
    %v1966 = vld [vmem:[#allocation8 + $0x1f8] sm:$0xff]
    %v1967 = vld [vmem:[#allocation8 + $0x200] sm:$0xff]
    %v1968 = vld [vmem:[#allocation8 + $0x208] sm:$0xff]
    %v1969 = vld [vmem:[#allocation8 + $0x210] sm:$0xff]
    %v1970 = vld [vmem:[#allocation8 + $0x218] sm:$0xff]
    %v1971 = vld [vmem:[#allocation8 + $0x220] sm:$0xff]
    %v1972 = vld [vmem:[#allocation8 + $0x228] sm:$0xff]
    %v1973 = vld [vmem:[#allocation8 + $0x230] sm:$0xff]
    %v1974 = vld [vmem:[#allocation8 + $0x238] sm:$0xff]
    %v1975 = vld [vmem:[#allocation8 + $0x240] sm:$0xff]
    %v1976 = vld [vmem:[#allocation8 + $0x248] sm:$0xff]
    %v1977 = vld [vmem:[#allocation8 + $0x250] sm:$0xff]
    %v1978 = vld [vmem:[#allocation8 + $0x258] sm:$0xff]
    %v1979 = vld [vmem:[#allocation8 + $0x260] sm:$0xff]
    %v1980 = vld [vmem:[#allocation8 + $0x268] sm:$0xff]
    %v1981 = vld [vmem:[#allocation8 + $0x270] sm:$0xff]
    %v1982 = vld [vmem:[#allocation8 + $0x278] sm:$0xff]
    %v1983 = vld [vmem:[#allocation8 + $0x280] sm:$0xff]
    %v1984 = vld [vmem:[#allocation8 + $0x288] sm:$0xff]
    %v1985 = vld [vmem:[#allocation8 + $0x290] sm:$0xff]
    %v1986 = vld [vmem:[#allocation8 + $0x298] sm:$0xff]
    %v1987 = vld [vmem:[#allocation8 + $0x2a0] sm:$0xff]
    %v1988 = vld [vmem:[#allocation8 + $0x2a8] sm:$0xff]
    %v1989 = vld [vmem:[#allocation8 + $0x2b0] sm:$0xff]
    %v1990 = vld [vmem:[#allocation8 + $0x2b8] sm:$0xff]
    %v1991 = vld [vmem:[#allocation8 + $0x2c0] sm:$0xff]
    %v1992 = vld [vmem:[#allocation8 + $0x2c8] sm:$0xff]
    %v1993 = vld [vmem:[#allocation8 + $0x2d0] sm:$0xff]
    %v1994 = vld [vmem:[#allocation8 + $0x2d8] sm:$0xff]
    %v1995 = vld [vmem:[#allocation8 + $0x2e0] sm:$0xff]
    %v1996 = vld [vmem:[#allocation8 + $0x2e8] sm:$0xff]
    %v1997 = vld [vmem:[#allocation8 + $0x2f0] sm:$0xff]
    %v1998 = vld [vmem:[#allocation8 + $0x2f8] sm:$0xff]
    %v1999 = vld [vmem:[#allocation8 + $0x300] sm:$0xff]
    %v2000 = vld [vmem:[#allocation8 + $0x308] sm:$0xff]
    %v2001 = vld [vmem:[#allocation8 + $0x310] sm:$0xff]
    %v2002 = vld [vmem:[#allocation8 + $0x318] sm:$0xff]
    %v2003 = vld [vmem:[#allocation8 + $0x320] sm:$0xff]
    %v2004 = vld [vmem:[#allocation8 + $0x328] sm:$0xff]
    %v2005 = vld [vmem:[#allocation8 + $0x330] sm:$0xff]
    %v2006 = vld [vmem:[#allocation8 + $0x338] sm:$0xff]
    %v2007 = vld [vmem:[#allocation8 + $0x340] sm:$0xff]
    %v2008 = vld [vmem:[#allocation8 + $0x348] sm:$0xff]
    %v2009 = vld [vmem:[#allocation8 + $0x350] sm:$0xff]
    %v2010 = vld [vmem:[#allocation8 + $0x358] sm:$0xff]
    %v2011 = vld [vmem:[#allocation8 + $0x360] sm:$0xff]
    %v2012 = vld [vmem:[#allocation8 + $0x368] sm:$0xff]
    %v2013 = vld [vmem:[#allocation8 + $0x370] sm:$0xff]
    %v2014 = vld [vmem:[#allocation8 + $0x378] sm:$0xff]
    %v2015 = vld [vmem:[#allocation8 + $0x380] sm:$0xff]
    %v2016 = vld [vmem:[#allocation8 + $0x388] sm:$0xff]
    %v2017 = vld [vmem:[#allocation8 + $0x390] sm:$0xff]
    %v2018 = vld [vmem:[#allocation8 + $0x398] sm:$0xff]
    %v2019 = vld [vmem:[#allocation8 + $0x3a0] sm:$0xff]
    %v2020 = vld [vmem:[#allocation8 + $0x3a8] sm:$0xff]
    %v2021 = vld [vmem:[#allocation8 + $0x3b0] sm:$0xff]
    %v2022 = vld [vmem:[#allocation8 + $0x3b8] sm:$0xff]
    %v2023 = vld [vmem:[#allocation8 + $0x3c0] sm:$0xff]
    %v2024 = vld [vmem:[#allocation8 + $0x3c8] sm:$0xff]
    %v2025 = vld [vmem:[#allocation8 + $0x3d0] sm:$0xff]
    %v2026 = vld [vmem:[#allocation8 + $0x3d8] sm:$0xff]
    %v2027 = vld [vmem:[#allocation8 + $0x3e0] sm:$0xff]
    %v2028 = vld [vmem:[#allocation8 + $0x3e8] sm:$0xff]
    %v2029 = vld [vmem:[#allocation8 + $0x3f0] sm:$0xff]
    %v2030 = vld [vmem:[#allocation8 + $0x3f8] sm:$0xff]
    %v2031 = vld [vmem:[#allocation10] sm:$0x3]
    %v2033 = vperm.slane %v2031, 0
    %v2034 = vperm.slane %v2031, 1
    %2037 = vmatpush.msra.mxu0 %v1933
    %2038 = vmatpush.msra.mxu0 %v1931
    %2039 = vmatpush.msra.mxu0 %v1929
    %2040 = vmatpush.msra.mxu0 %v1927
    %2041 = vmatpush.msra.mxu0 %v1925
    %2042 = vmatpush.msra.mxu0 %v1923
    %2043 = vmatpush.msra.mxu0 %v1921
    %2044 = vmatpush.msra.mxu0 %v1919
    %2045 = vmatpush.msra.mxu0 %v1917
    %2046 = vmatpush.msra.mxu0 %v1915
    %2047 = vmatpush.msra.mxu0 %v1913
    %2048 = vmatpush.msra.mxu0 %v1911
    %2049 = vmatpush.msra.mxu0 %v1909
    %2050 = vmatpush.msra.mxu0 %v1907
    %2051 = vmatpush.msra.mxu0 %v1905
    %2052 = vmatpush.msra.mxu0 %v1903
    %2053 = vmatmul.f32.gmra.mxu0 %v1899
    %v2054 = vpop.f32.mrf.mxu0
    %v2055 = vadd.f32 %v2033, %v2054
    %2056 = vdwg.mxu0
    %2057 = vmatpush.msra.mxu0 %v1965
    %2058 = vmatpush.msra.mxu0 %v1963
    %2059 = vmatpush.msra.mxu0 %v1961
    %2060 = vmatpush.msra.mxu0 %v1959
    %2061 = vmatpush.msra.mxu0 %v1957
    %2062 = vmatpush.msra.mxu0 %v1955
    %2063 = vmatpush.msra.mxu0 %v1953
    %2064 = vmatpush.msra.mxu0 %v1951
    %2065 = vmatpush.msra.mxu0 %v1949
    %2066 = vmatpush.msra.mxu0 %v1947
    %2067 = vmatpush.msra.mxu0 %v1945
    %2068 = vmatpush.msra.mxu0 %v1943
    %2069 = vmatpush.msra.mxu0 %v1941
    %2070 = vmatpush.msra.mxu0 %v1939
    %2071 = vmatpush.msra.mxu0 %v1937
    %2072 = vmatpush.msra.mxu0 %v1935
    %2073 = vmatmul.f32.gmra.mxu0 %v1900
    %v2074 = vpop.f32.mrf.mxu0
    %v2075 = vadd.f32 %v2055, %v2074
    %2076 = vdwg.mxu0
    %2077 = vmatpush.msra.mxu0 %v1997
    %2078 = vmatpush.msra.mxu0 %v1995
    %2079 = vmatpush.msra.mxu0 %v1993
    %2080 = vmatpush.msra.mxu0 %v1991
    %2081 = vmatpush.msra.mxu0 %v1989
    %2082 = vmatpush.msra.mxu0 %v1987
    %2083 = vmatpush.msra.mxu0 %v1985
    %2084 = vmatpush.msra.mxu0 %v1983
    %2085 = vmatpush.msra.mxu0 %v1981
    %2086 = vmatpush.msra.mxu0 %v1979
    %2087 = vmatpush.msra.mxu0 %v1977
    %2088 = vmatpush.msra.mxu0 %v1975
    %2089 = vmatpush.msra.mxu0 %v1973
    %2090 = vmatpush.msra.mxu0 %v1971
    %2091 = vmatpush.msra.mxu0 %v1969
    %2092 = vmatpush.msra.mxu0 %v1967
    %2093 = vmatmul.f32.gmra.mxu0 %v1901
    %v2094 = vpop.f32.mrf.mxu0
    %v2095 = vadd.f32 %v2075, %v2094
    %2096 = vdwg.mxu0
    %2097 = vmatpush.msra.mxu0 %v2029
    %2098 = vmatpush.msra.mxu0 %v2027
    %2099 = vmatpush.msra.mxu0 %v2025
    %2100 = vmatpush.msra.mxu0 %v2023
    %2101 = vmatpush.msra.mxu0 %v2021
    %2102 = vmatpush.msra.mxu0 %v2019
    %2103 = vmatpush.msra.mxu0 %v2017
    %2104 = vmatpush.msra.mxu0 %v2015
    %2105 = vmatpush.msra.mxu0 %v2013
    %2106 = vmatpush.msra.mxu0 %v2011
    %2107 = vmatpush.msra.mxu0 %v2009
    %2108 = vmatpush.msra.mxu0 %v2007
    %2109 = vmatpush.msra.mxu0 %v2005
    %2110 = vmatpush.msra.mxu0 %v2003
    %2111 = vmatpush.msra.mxu0 %v2001
    %2112 = vmatpush.msra.mxu0 %v1999
    %2113 = vmatmul.f32.gmra.mxu0 %v1902
    %v2114 = vpop.f32.mrf.mxu0
    %v2115 = vadd.f32 %v2095, %v2114
    %2116 = vdwg.mxu0
    %2117 = vmatpush.msra.mxu0 %v1934
    %2118 = vmatpush.msra.mxu0 %v1932
    %2119 = vmatpush.msra.mxu0 %v1930
    %2120 = vmatpush.msra.mxu0 %v1928
    %2121 = vmatpush.msra.mxu0 %v1926
    %2122 = vmatpush.msra.mxu0 %v1924
    %2123 = vmatpush.msra.mxu0 %v1922
    %2124 = vmatpush.msra.mxu0 %v1920
    %2125 = vmatpush.msra.mxu0 %v1918
    %2126 = vmatpush.msra.mxu0 %v1916
    %2127 = vmatpush.msra.mxu0 %v1914
    %2128 = vmatpush.msra.mxu0 %v1912
    %2129 = vmatpush.msra.mxu0 %v1910
    %2130 = vmatpush.msra.mxu0 %v1908
    %2131 = vmatpush.msra.mxu0 %v1906
    %2132 = vmatpush.msra.mxu0 %v1904
    %2133 = vmatmul.f32.gmra.mxu0 %v1899
    %v2134 = vpop.f32.mrf.mxu0
    %v2135 = vadd.f32 %v2034, %v2134
    %2136 = vdwg.mxu0
    %2137 = vmatpush.msra.mxu0 %v1966
    %2138 = vmatpush.msra.mxu0 %v1964
    %2139 = vmatpush.msra.mxu0 %v1962
    %2140 = vmatpush.msra.mxu0 %v1960
    %2141 = vmatpush.msra.mxu0 %v1958
    %2142 = vmatpush.msra.mxu0 %v1956
    %2143 = vmatpush.msra.mxu0 %v1954
    %2144 = vmatpush.msra.mxu0 %v1952
    %2145 = vmatpush.msra.mxu0 %v1950
    %2146 = vmatpush.msra.mxu0 %v1948
    %2147 = vmatpush.msra.mxu0 %v1946
    %2148 = vmatpush.msra.mxu0 %v1944
    %2149 = vmatpush.msra.mxu0 %v1942
    %2150 = vmatpush.msra.mxu0 %v1940
    %2151 = vmatpush.msra.mxu0 %v1938
    %2152 = vmatpush.msra.mxu0 %v1936
    %2153 = vmatmul.f32.gmra.mxu0 %v1900
    %v2154 = vpop.f32.mrf.mxu0
    %v2155 = vadd.f32 %v2135, %v2154
    %2156 = vdwg.mxu0
    %2157 = vmatpush.msra.mxu0 %v1998
    %2158 = vmatpush.msra.mxu0 %v1996
    %2159 = vmatpush.msra.mxu0 %v1994
    %2160 = vmatpush.msra.mxu0 %v1992
    %2161 = vmatpush.msra.mxu0 %v1990
    %2162 = vmatpush.msra.mxu0 %v1988
    %2163 = vmatpush.msra.mxu0 %v1986
    %2164 = vmatpush.msra.mxu0 %v1984
    %2165 = vmatpush.msra.mxu0 %v1982
    %2166 = vmatpush.msra.mxu0 %v1980
    %2167 = vmatpush.msra.mxu0 %v1978
    %2168 = vmatpush.msra.mxu0 %v1976
    %2169 = vmatpush.msra.mxu0 %v1974
    %2170 = vmatpush.msra.mxu0 %v1972
    %2171 = vmatpush.msra.mxu0 %v1970
    %2172 = vmatpush.msra.mxu0 %v1968
    %2173 = vmatmul.f32.gmra.mxu0 %v1901
    %v2174 = vpop.f32.mrf.mxu0
    %v2175 = vadd.f32 %v2155, %v2174
    %2176 = vdwg.mxu0
    %2177 = vmatpush.msra.mxu0 %v2030
    %2178 = vmatpush.msra.mxu0 %v2028
    %2179 = vmatpush.msra.mxu0 %v2026
    %2180 = vmatpush.msra.mxu0 %v2024
    %2181 = vmatpush.msra.mxu0 %v2022
    %2182 = vmatpush.msra.mxu0 %v2020
    %2183 = vmatpush.msra.mxu0 %v2018
    %2184 = vmatpush.msra.mxu0 %v2016
    %2185 = vmatpush.msra.mxu0 %v2014
    %2186 = vmatpush.msra.mxu0 %v2012
    %2187 = vmatpush.msra.mxu0 %v2010
    %2188 = vmatpush.msra.mxu0 %v2008
    %2189 = vmatpush.msra.mxu0 %v2006
    %2190 = vmatpush.msra.mxu0 %v2004
    %2191 = vmatpush.msra.mxu0 %v2002
    %2192 = vmatpush.msra.mxu0 %v2000
    %2193 = vmatmul.f32.gmra.mxu0 %v1902
    %v2194 = vpop.f32.mrf.mxu0
    %v2195 = vadd.f32 %v2175, %v2194
    %2196 = vdwg.mxu0
    %v2197 = vmax.f32 %v2115, 0.0
    %v2198 = vmax.f32 %v2195, 0.0
    %v2199 = vld [vmem:[#allocation11] sm:$0xff]
    %v2200 = vld [vmem:[#allocation11 + $0x8] sm:$0xff]
    %v2201 = vld [vmem:[#allocation11 + $0x10] sm:$0xff]
    %v2202 = vld [vmem:[#allocation11 + $0x18] sm:$0xff]
    %v2203 = vld [vmem:[#allocation11 + $0x20] sm:$0xff]
    %v2204 = vld [vmem:[#allocation11 + $0x28] sm:$0xff]
    %v2205 = vld [vmem:[#allocation11 + $0x30] sm:$0xff]
    %v2206 = vld [vmem:[#allocation11 + $0x38] sm:$0xff]
    %v2207 = vld [vmem:[#allocation11 + $0x40] sm:$0xff]
    %v2208 = vld [vmem:[#allocation11 + $0x48] sm:$0xff]
    %v2209 = vld [vmem:[#allocation11 + $0x50] sm:$0xff]
    %v2210 = vld [vmem:[#allocation11 + $0x58] sm:$0xff]
    %v2211 = vld [vmem:[#allocation11 + $0x60] sm:$0xff]
    %v2212 = vld [vmem:[#allocation11 + $0x68] sm:$0xff]
    %v2213 = vld [vmem:[#allocation11 + $0x70] sm:$0xff]
    %v2214 = vld [vmem:[#allocation11 + $0x78] sm:$0xff]
    %v2215 = vld [vmem:[#allocation11 + $0x80] sm:$0xff]
    %v2216 = vld [vmem:[#allocation11 + $0x88] sm:$0xff]
    %v2217 = vld [vmem:[#allocation11 + $0x90] sm:$0xff]
    %v2218 = vld [vmem:[#allocation11 + $0x98] sm:$0xff]
    %v2219 = vld [vmem:[#allocation11 + $0xa0] sm:$0xff]
    %v2220 = vld [vmem:[#allocation11 + $0xa8] sm:$0xff]
    %v2221 = vld [vmem:[#allocation11 + $0xb0] sm:$0xff]
    %v2222 = vld [vmem:[#allocation11 + $0xb8] sm:$0xff]
    %v2223 = vld [vmem:[#allocation11 + $0xc0] sm:$0xff]
    %v2224 = vld [vmem:[#allocation11 + $0xc8] sm:$0xff]
    %v2225 = vld [vmem:[#allocation11 + $0xd0] sm:$0xff]
    %v2226 = vld [vmem:[#allocation11 + $0xd8] sm:$0xff]
    %v2227 = vld [vmem:[#allocation11 + $0xe0] sm:$0xff]
    %v2228 = vld [vmem:[#allocation11 + $0xe8] sm:$0xff]
    %v2229 = vld [vmem:[#allocation11 + $0xf0] sm:$0xff]
    %v2230 = vld [vmem:[#allocation11 + $0xf8] sm:$0xff]
    %v2231 = vld [vmem:[#allocation13] sm:$0x1]
    %v2233 = vperm.slane %v2231, 0
    %2235 = vmatpush.msra.mxu0 %v2214
    %2236 = vmatpush.msra.mxu0 %v2213
    %2237 = vmatpush.msra.mxu0 %v2212
    %2238 = vmatpush.msra.mxu0 %v2211
    %2239 = vmatpush.msra.mxu0 %v2210
    %2240 = vmatpush.msra.mxu0 %v2209
    %2241 = vmatpush.msra.mxu0 %v2208
    %2242 = vmatpush.msra.mxu0 %v2207
    %2243 = vmatpush.msra.mxu0 %v2206
    %2244 = vmatpush.msra.mxu0 %v2205
    %2245 = vmatpush.msra.mxu0 %v2204
    %2246 = vmatpush.msra.mxu0 %v2203
    %2247 = vmatpush.msra.mxu0 %v2202
    %2248 = vmatpush.msra.mxu0 %v2201
    %2249 = vmatpush.msra.mxu0 %v2200
    %2250 = vmatpush.msra.mxu0 %v2199
    %2251 = vmatmul.f32.gmra.mxu0 %v2197
    %v2252 = vpop.f32.mrf.mxu0
    %v2253 = vadd.f32 %v2233, %v2252
    %2254 = vdwg.mxu0
    %2255 = vmatpush.msra.mxu0 %v2230
    %2256 = vmatpush.msra.mxu0 %v2229
    %2257 = vmatpush.msra.mxu0 %v2228
    %2258 = vmatpush.msra.mxu0 %v2227
    %2259 = vmatpush.msra.mxu0 %v2226
    %2260 = vmatpush.msra.mxu0 %v2225
    %2261 = vmatpush.msra.mxu0 %v2224
    %2262 = vmatpush.msra.mxu0 %v2223
    %2263 = vmatpush.msra.mxu0 %v2222
    %2264 = vmatpush.msra.mxu0 %v2221
    %2265 = vmatpush.msra.mxu0 %v2220
    %2266 = vmatpush.msra.mxu0 %v2219
    %2267 = vmatpush.msra.mxu0 %v2218
    %2268 = vmatpush.msra.mxu0 %v2217
    %2269 = vmatpush.msra.mxu0 %v2216
    %2270 = vmatpush.msra.mxu0 %v2215
    %2271 = vmatmul.f32.gmra.mxu0 %v2198
    %v2272 = vpop.f32.mrf.mxu0
    %v2273 = vadd.f32 %v2253, %v2272
    %2274 = vdwg.mxu0
    %v2275 = vmax.f32 %v2273, 0.0
    %v2276 = vld [vmem:[#allocation14] sm:$0x1]
    %v2278 = vperm.slane %v2276, 0
    %v2280 = vmul.f32 %v2275, %v2278
    %2281 = vadd.xlane.f32.xlu0 %v2280
    %v2282 = vpop.xlane.xlu0 %2281
    %v2283 = vld [vmem:[#allocation2] sm:$0x1]
    %v2285 = vperm.slane %v2283, 0
    %v2287 = vadd.f32 %v2282, %v2285
    %v2288 = vxor.u32 %v2287, 2147483648
    %v2289 = vmul.f32 %v2288, 1.442695
    %v2290 = vpow.pop %v2289
    %v2291 = vadd.f32 %v2290, 1.0
    %v2292 = vrcp.pop %v2291
    %v2293 = vmul.f32 %v2291, %v2292
    %v2294 = vsub.f32 1.0, %v2293
    %v2295 = vmul.f32 %v2292, %v2294
    %v2296 = vadd.f32 %v2292, %v2295
    %vm2297 = vweird.f32 %v2291
    %vm2298 = vweird.f32 %v2292
    %vm2299 = vmor %vm2297, %vm2298
    %v2300 = vsel %vm2299, %v2292, %v2296
    %v2301 = vand.u32 2147483647, %v2291
    %vm2302 = vcmp.eq.f32.partialorder %v2301, 8.507059e+37
    %v2303 = vand.u32 %v2291, 2147483648
    %v2304 = vor.u32 1.1754944e-38, %v2303
    %v2305 = vsel %vm2302, %v2304, %v2300
    %v2306 = vmul.f32 1.0, %v2305
    %vm2307 = vcmask 7168
    %2308 = vst.msk [vmem:[%s9] sm:$0xff] %vm2307, %v2306
    // Predicated region
    $region70: #{tpu_custom_call.1} parent=1 // pred_check
      _
    $region71: #{tpu_custom_call.1} parent=1 // pred_check_branch
      %2310 = sbr.rel (0) target = $region73
    $region72: #{tpu_custom_call.1} parent=1 // pred_region
      _
    $region73: #{tpu_custom_call.1} parent=1 // pred_fallthru
      _
    // Predicated region
    $region74: #{tpu_custom_call.1} parent=1 // pred_check
      _
    $region75: #{tpu_custom_call.1} parent=1 // pred_check_branch
      %2312 = sbr.rel (0) target = $region77
    $region76: #{tpu_custom_call.1} parent=1 // pred_region
      _
    $region77: #{tpu_custom_call.1} parent=1 // pred_fallthru
      _
    %2313 = vsyncpa [#allocation4], 1
    %2314 = vsyncpa [#allocation6], 1
    %2315 = vsyncpa [#allocation9], 1
    %2316 = vsyncpa [#allocation12], 1
    %2317 = vsyncpa [#allocation15], 1

</llo_original>
